<compile_context>
chip_gen: v6e
topology: v6e:2x2x1
jax: 0.10.0
libtpu: 0.0.40
codegen_flags: <defaults>
</compile_context>

<pallas_src>
import functools
import math

import jax
import jax.numpy as jnp
from jax.experimental import pallas as pl
from jax.experimental.pallas import tpu as pltpu


# ----------------------------------------------------------------------------
# In-kernel helpers (operate on traced VMEM values)
# ----------------------------------------------------------------------------
def _rms_norm(x, w, eps):
    """RMSNorm over the fused inner dim (H*D), matching RMSNorm(inner_dim)."""
    ms = jnp.mean(x * x, axis=-1, keepdims=True)
    return (x * jax.lax.rsqrt(ms + eps)) * w


def _rope_head(xh, cos, sin, half):
    """RoPE on one head slice already laid out rotate-half style.

    xh columns are [even pair elems | odd pair elems]; `sin` carries the -1
    sign on its first half, so the whole rotation is a half-swap (lane
    permute) + mul/add — no MXU rotation matmul.
    (pltpu.roll(xh, half, axis=1) is the single-XLU-op alternative once
    head_dim is lane-aligned, i.e. >= 128.)
    """
    rot = jnp.concatenate([xh[:, half:], xh[:, :half]], axis=1)
    return xh * cos + rot * sin


def _attention_core(q, k, v, cos, sin, w_o, *, H, D, rope_k):
    """q: (Lq, H*D), k/v: (Lk, H*D) f32 post-norm; returns (Lq, C_pad) f32.

    Heads stay in their contiguous D-wide lane slices; each head's attention
    output is folded straight into its slice of w_o and accumulated, so no
    lane-axis concatenation of heads is ever materialized.
    """
    mxu_dt = w_o.dtype          # bf16 params => bf16 MXU operands, f32 accum
    half = D // 2
    out = None
    for h in range(H):
        sl = slice(h * D, (h + 1) * D)
        qh = _rope_head(q[:, sl], cos, sin, half)
        kh = k[:, sl]
        if rope_k:
            kh = _rope_head(kh, cos, sin, half)
        vh = v[:, sl]
        # QK^T contracting K's last dim directly (no explicit transpose).
        s = jax.lax.dot_general(qh.astype(mxu_dt), kh.astype(mxu_dt),
                                (((1,), (1,)), ((), ())),
                                preferred_element_type=jnp.float32)
        m = jnp.max(s, axis=-1, keepdims=True)
        p = jnp.exp(s - m)                                    # f32 softmax
        denom = jnp.sum(p, axis=-1, keepdims=True)
        o = jnp.dot(p.astype(mxu_dt), vh.astype(mxu_dt),
                    preferred_element_type=jnp.float32) / denom
        contrib = jnp.dot(o.astype(mxu_dt), w_o[sl, :].astype(mxu_dt),
                          preferred_element_type=jnp.float32)
        out = contrib if out is None else out + contrib
    return out


# ----------------------------------------------------------------------------
# Fused forward kernels (one grid step == one batch element)
# ----------------------------------------------------------------------------
def _self_attention_kernel(x_ref, w_qkv_ref, qnw_ref, knw_ref, cos_ref,
                           sin_ref, w_o_ref, out_ref, *, H, D, eps, rope_k):
    inner = H * D
    f32 = jnp.float32
    x = x_ref[...].astype(w_qkv_ref.dtype)
    # Fused QKV projection: one (L, C) x (C, 3*inner) MXU matmul, f32 accum.
    qkv = jnp.dot(x, w_qkv_ref[...], preferred_element_type=f32)
    q = _rms_norm(qkv[:, :inner], qnw_ref[...].astype(f32), eps)
    k = _rms_norm(qkv[:, inner:2 * inner], knw_ref[...].astype(f32), eps)
    v = qkv[:, 2 * inner:]
    out = _attention_core(q, k, v, cos_ref[...].astype(f32),
                          sin_ref[...].astype(f32), w_o_ref[...],
                          H=H, D=D, rope_k=rope_k)
    out_ref[...] = out.astype(out_ref.dtype)


def _cross_attention_kernel(xq_ref, xkv_ref, w_q_ref, w_kv_ref, qnw_ref,
                            knw_ref, cos_ref, sin_ref, w_o_ref, out_ref, *,
                            H, D, eps, rope_k):
    inner = H * D
    f32 = jnp.float32
    wdt = w_q_ref.dtype
    q = jnp.dot(xq_ref[...].astype(wdt), w_q_ref[...],
                preferred_element_type=f32)
    kv = jnp.dot(xkv_ref[...].astype(wdt), w_kv_ref[...],
                 preferred_element_type=f32)
    q = _rms_norm(q, qnw_ref[...].astype(f32), eps)
    k = _rms_norm(kv[:, :inner], knw_ref[...].astype(f32), eps)
    v = kv[:, inner:]
    out = _attention_core(q, k, v, cos_ref[...].astype(f32),
                          sin_ref[...].astype(f32), w_o_ref[...],
                          H=H, D=D, rope_k=rope_k)
    out_ref[...] = out.astype(out_ref.dtype)


# ----------------------------------------------------------------------------
# One-time parameter / table preparation (NOT per forward call)
# ----------------------------------------------------------------------------
def prepare_attention_params(raw, eps=1e-6):
    """Permute q/k weights into rotate-half layout, fuse projections, fold the
    softmax scale into q_norm_w, and pad w_o to a lane-dense output width."""
    H, D = int(raw["heads"]), int(raw["head_dim"])
    assert D % 2 == 0, "RoPE requires an even head_dim"
    inner = H * D
    scale = 1.0 / math.sqrt(D)

    # Per-head rotate-half column permutation: within each head, even pair
    # elements first, odd pair elements second.
    d_idx = jnp.arange(D)
    local = jnp.concatenate([d_idx[0::2], d_idx[1::2]])                 # (D,)
    perm = (jnp.arange(H)[:, None] * D + local[None, :]).reshape(-1)    # (H*D,)

    w_q = raw["w_q"][:, perm]
    w_k = raw["w_k"][:, perm]
    w_v = raw["w_v"]
    # 1/sqrt(D) softmax scale folded into the q-norm weight (exact: RMSNorm
    # weight and RoPE are linear, and the norm axis is the full inner dim).
    qnw = (raw["q_norm_w"].astype(jnp.float32) * scale)[perm].reshape(1, inner)
    knw = raw["k_norm_w"].astype(jnp.float32)[perm].reshape(1, inner)

    out_dim = raw["w_o"].shape[1]
    pad = (-out_dim) % 128            # lane-dense output stores
    w_o = jnp.pad(raw["w_o"], ((0, 0), (0, pad)))

    return {
        "heads": H, "head_dim": D, "eps": float(eps), "out_dim": int(out_dim),
        "w_qkv": jnp.concatenate([w_q, w_k, w_v], axis=1),   # self-attn path
        "w_q": w_q,
        "w_kv": jnp.concatenate([w_k, w_v], axis=1),         # cross-attn path
        "w_o": w_o,
        "q_norm_w": qnw, "k_norm_w": knw,
    }


def prepare_rope_tables(rope_pos_embed):
    """(L, D, 2) stacked (cos, sin) -> rotate-half-layout (L, D) tables.

    The sign of the rotation is folded into the first half of the sin table.
    Tables are head- and batch-independent (no tiling)."""
    cos = rope_pos_embed[..., 0].astype(jnp.float32)
    sin = rope_pos_embed[..., 1].astype(jnp.float32)
    cos_t = jnp.concatenate([cos[:, 0::2], cos[:, 1::2]], axis=-1)
    sin_t = jnp.concatenate([-sin[:, 0::2], sin[:, 1::2]], axis=-1)
    return cos_t, sin_t


def _full_spec(arr):
    # Small 2-D weight/table operands: full-array block, constant index_map,
    # so they stay resident across the batch grid (no re-fetch per step).
    return pl.BlockSpec(arr.shape, lambda b: (0, 0))


# ----------------------------------------------------------------------------
# Wrapper: mirrors Attention.forward (max_seqlen_q=None branch, no mask, eval)
# ----------------------------------------------------------------------------
def attention_forward(prep, inputs_q, inputs_kv=None, rope_tables=None,
                      cross_attention=False):
    assert rope_tables is not None
    H, D = prep["heads"], prep["head_dim"]
    B, Lq, Cq = inputs_q.shape
    cos_t, sin_t = rope_tables
    out_pad = prep["w_o"].shape[1]
    out_dim = prep["out_dim"]
    out_shape = jax.ShapeDtypeStruct((B, Lq, out_pad), inputs_q.dtype)
    cparams = pltpu.CompilerParams(dimension_semantics=("parallel",))

    if inputs_kv is None:
        kern = functools.partial(_self_attention_kernel, H=H, D=D,
                                 eps=prep["eps"], rope_k=not cross_attention)
        out = pl.pallas_call(
            kern,
            out_shape=out_shape,
            grid=(B,),
            in_specs=[
                pl.BlockSpec((None, Lq, Cq), lambda b: (b, 0, 0)),
                _full_spec(prep["w_qkv"]),
                _full_spec(prep["q_norm_w"]),
                _full_spec(prep["k_norm_w"]),
                _full_spec(cos_t),
                _full_spec(sin_t),
                _full_spec(prep["w_o"]),
            ],
            out_specs=pl.BlockSpec((None, Lq, out_pad), lambda b: (b, 0, 0)),
            compiler_params=cparams,
        )(inputs_q, prep["w_qkv"], prep["q_norm_w"], prep["k_norm_w"],
          cos_t, sin_t, prep["w_o"])
    else:
        _, Lk, Ckv = inputs_kv.shape
        if not cross_attention:
            assert Lk == Lq, "RoPE on K requires matching sequence lengths"
        kern = functools.partial(_cross_attention_kernel, H=H, D=D,
                                 eps=prep["eps"], rope_k=not cross_attention)
        out = pl.pallas_call(
            kern,
            out_shape=out_shape,
            grid=(B,),
            in_specs=[
                pl.BlockSpec((None, Lq, Cq), lambda b: (b, 0, 0)),
                pl.BlockSpec((None, Lk, Ckv), lambda b: (b, 0, 0)),
                _full_spec(prep["w_q"]),
                _full_spec(prep["w_kv"]),
                _full_spec(prep["q_norm_w"]),
                _full_spec(prep["k_norm_w"]),
                _full_spec(cos_t),
                _full_spec(sin_t),
                _full_spec(prep["w_o"]),
            ],
            out_specs=pl.BlockSpec((None, Lq, out_pad), lambda b: (b, 0, 0)),
            compiler_params=cparams,
        )(inputs_q, inputs_kv, prep["w_q"], prep["w_kv"],
          prep["q_norm_w"], prep["k_norm_w"], cos_t, sin_t, prep["w_o"])

    return out[..., :out_dim]


# ----------------------------------------------------------------------------
# Pure-JAX reference (no Pallas) — faithful to the PyTorch module
# ----------------------------------------------------------------------------
def apply_rotary_emb(x, freqs_cis):
    """x: (B, H, L, D), freqs_cis: (L, D, 2) stacked (cos, sin)."""
    cos = freqs_cis[..., 0][None, None]
    sin = freqs_cis[..., 1][None, None]
    xr = x.reshape(*x.shape[:-1], -1, 2)
    x_real, x_imag = xr[..., 0], xr[..., 1]
    x_rot = jnp.stack([-x_imag, x_real], axis=-1).reshape(x.shape)
    out = x.astype(jnp.float32) * cos + x_rot.astype(jnp.float32) * sin
    return out.astype(x.dtype)


def attention_reference(params, inputs_q, inputs_kv=None, rope_pos_embed=None,
                        cross_attention=False):
    H, D = params["heads"], params["head_dim"]
    inner = H * D
    inputs_kv = inputs_q if inputs_kv is None else inputs_kv
    B, Lq, _ = inputs_q.shape
    _, Lk, _ = inputs_kv.shape

    def rms(x, w, eps=1e-6):
        xf = x.astype(jnp.float32)
        out = xf * jax.lax.rsqrt(jnp.mean(xf * xf, axis=-1, keepdims=True) + eps)
        return (w * out).astype(x.dtype)

    q = rms(inputs_q @ params["w_q"], params["q_norm_w"])
    k = rms(inputs_kv @ params["w_k"], params["k_norm_w"])
    v = inputs_kv @ params["w_v"]

    q = q.reshape(B, Lq, H, D).transpose(0, 2, 1, 3)
    k = k.reshape(B, Lk, H, D).transpose(0, 2, 1, 3)
    v = v.reshape(B, Lk, H, D).transpose(0, 2, 1, 3)
    q = apply_rotary_emb(q, rope_pos_embed)
    if not cross_attention:
        k = apply_rotary_emb(k, rope_pos_embed)

    s = jnp.einsum("bhqd,bhkd->bhqk", q, k) / math.sqrt(D)
    p = jax.nn.softmax(s, axis=-1)
    o = jnp.einsum("bhqk,bhkd->bhqd", p, v)
    o = o.transpose(0, 2, 1, 3).reshape(B, Lq, inner)
    return o @ params["w_o"]


# ----------------------------------------------------------------------------
# Main
# ----------------------------------------------------------------------------
if __name__ == "__main__":
    B, L = 2, 8
    q_dim = 32
    heads, head_dim = 4, 16
    inner_dim = heads * head_dim

    key = jax.random.PRNGKey(0)
    ks = jax.random.split(key, 8)

    # Parameters stored as (in, out) = PyTorch weight.T ; bias=False.
    raw_params = {
        "heads": heads,
        "head_dim": head_dim,
        "w_q": 0.02 * jax.random.normal(ks[0], (q_dim, inner_dim), jnp.float32),
        "w_k": 0.02 * jax.random.normal(ks[1], (q_dim, inner_dim), jnp.float32),
        "w_v": 0.02 * jax.random.normal(ks[2], (q_dim, inner_dim), jnp.float32),
        "w_o": 0.02 * jax.random.normal(ks[3], (inner_dim, q_dim), jnp.float32),
        "q_norm_w": 1.0 + 0.01 * jax.random.normal(ks[4], (inner_dim,), jnp.float32),
        "k_norm_w": 1.0 + 0.01 * jax.random.normal(ks[5], (inner_dim,), jnp.float32),
    }

    # Inputs: self-attention (inputs_kv=None), no mask, eval mode.
    x = jax.random.normal(ks[6], (B, L, q_dim), jnp.float32)

    # RoPE table: (L, head_dim, 2) stacked (cos, sin); pairs share an angle.
    pos = jnp.arange(L, dtype=jnp.float32)
    inv_freq = 1.0 / (10000.0 ** (jnp.arange(0, head_dim, 2, dtype=jnp.float32) / head_dim))
    angles = pos[:, None] * inv_freq[None, :]                     # (L, D/2)
    angles = jnp.repeat(angles, 2, axis=-1)                       # (L, D)
    rope_pos_embed = jnp.stack([jnp.cos(angles), jnp.sin(angles)], axis=-1)

    # One-time setup (weight fusion, RoPE permutation, scale fold, padding).
    prep = prepare_attention_params(raw_params)
    rope_tables = prepare_rope_tables(rope_pos_embed)

    out = attention_forward(prep, x, None, rope_tables, cross_attention=False)
    out = jax.block_until_ready(out)

    ref = attention_reference(raw_params, x, None, rope_pos_embed,
                              cross_attention=False)
    assert out.shape == (B, L, q_dim)
    max_diff = float(jnp.max(jnp.abs(out - ref)))
    assert jnp.allclose(out, ref, atol=1e-4, rtol=1e-4), f"max abs diff {max_diff}"
    print("KERNEL_OK")
</pallas_src>

<mosaic_0001>
module attributes {stable_mosaic.version = 11 : i64} {
  func.func @_self_attention_kernel(%arg0: i32, %arg1: memref<1x8x32xf32, #tpu.memory_space<vmem>>, %arg2: memref<32x192xf32, #tpu.memory_space<vmem>>, %arg3: memref<1x64xf32, #tpu.memory_space<vmem>>, %arg4: memref<1x64xf32, #tpu.memory_space<vmem>>, %arg5: memref<8x16xf32, #tpu.memory_space<vmem>>, %arg6: memref<8x16xf32, #tpu.memory_space<vmem>>, %arg7: memref<64x128xf32, #tpu.memory_space<vmem>>, %arg8: memref<1x8x128xf32, #tpu.memory_space<vmem>>) attributes {dimension_semantics = [#tpu.dimension_semantics<parallel>], iteration_bounds = array<i64: 2>, scalar_prefetch = 0 : i64, scratch_operands = 0 : i64, tpu.core_type = #tpu.core_type<tc>, window_params = [{transform_indices = @transform_0, window_bounds = array<i64: 1, 8, 32>}, {pipeline_mode = #tpu.pipeline_mode<synchronous>, transform_indices = @transform_1, window_bounds = array<i64: 32, 192>}, {pipeline_mode = #tpu.pipeline_mode<synchronous>, transform_indices = @transform_2, window_bounds = array<i64: 1, 64>}, {pipeline_mode = #tpu.pipeline_mode<synchronous>, transform_indices = @transform_3, window_bounds = array<i64: 1, 64>}, {pipeline_mode = #tpu.pipeline_mode<synchronous>, transform_indices = @transform_4, window_bounds = array<i64: 8, 16>}, {pipeline_mode = #tpu.pipeline_mode<synchronous>, transform_indices = @transform_5, window_bounds = array<i64: 8, 16>}, {pipeline_mode = #tpu.pipeline_mode<synchronous>, transform_indices = @transform_6, window_bounds = array<i64: 64, 128>}, {transform_indices = @transform_7, window_bounds = array<i64: 1, 8, 128>}]} {
    %c0 = arith.constant 0 : index
    %c0_0 = arith.constant 0 : index
    %c0_1 = arith.constant 0 : index
    %0 = vector.load %arg1[%c0, %c0_0, %c0_1] : memref<1x8x32xf32, #tpu.memory_space<vmem>>, vector<1x8x32xf32>
    %1 = vector.shape_cast %0 : vector<1x8x32xf32> to vector<8x32xf32>
    %c0_2 = arith.constant 0 : index
    %c0_3 = arith.constant 0 : index
    %2 = vector.load %arg2[%c0_2, %c0_3] : memref<32x192xf32, #tpu.memory_space<vmem>>, vector<32x192xf32>
    %cst = arith.constant dense<0.000000e+00> : vector<8x192xf32>
    %3 = tpu.matmul %1, %2, %cst {dimension_numbers = #tpu.dot_dimension_numbers<[1], [0], [0], [1], [0, 0, 1, 1], [], []>} : vector<8x32xf32>, vector<32x192xf32>, vector<8x192xf32> -> vector<8x192xf32>
    %4 = vector.extract_strided_slice %3 {offsets = [0, 0], sizes = [8, 64], strides = [1, 1]} : vector<8x192xf32> to vector<8x64xf32>
    %c0_4 = arith.constant 0 : index
    %c0_5 = arith.constant 0 : index
    %5 = vector.load %arg3[%c0_4, %c0_5] : memref<1x64xf32, #tpu.memory_space<vmem>>, vector<1x64xf32>
    %6 = arith.mulf %4, %4 : vector<8x64xf32>
    %cst_6 = arith.constant dense<0.000000e+00> : vector<8xf32>
    %7 = vector.multi_reduction <add>, %6, %cst_6 [1] : vector<8x64xf32> to vector<8xf32>
    %8 = vector.shape_cast %7 : vector<8xf32> to vector<8x1xf32>
    %cst_7 = arith.constant 6.400000e+01 : f32
    %9 = vector.broadcast %cst_7 : f32 to vector<8x1xf32>
    %10 = arith.divf %8, %9 : vector<8x1xf32>
    %cst_8 = arith.constant 9.99999997E-7 : f32
    %11 = vector.broadcast %cst_8 : f32 to vector<8x1xf32>
    %12 = arith.addf %10, %11 : vector<8x1xf32>
    %13 = math.rsqrt %12 : vector<8x1xf32>
    %14 = vector.broadcast %13 : vector<8x1xf32> to vector<8x64xf32>
    %15 = arith.mulf %4, %14 : vector<8x64xf32>
    %16 = vector.broadcast %5 : vector<1x64xf32> to vector<8x64xf32>
    %17 = arith.mulf %15, %16 : vector<8x64xf32>
    %18 = vector.extract_strided_slice %3 {offsets = [0, 64], sizes = [8, 64], strides = [1, 1]} : vector<8x192xf32> to vector<8x64xf32>
    %c0_9 = arith.constant 0 : index
    %c0_10 = arith.constant 0 : index
    %19 = vector.load %arg4[%c0_9, %c0_10] : memref<1x64xf32, #tpu.memory_space<vmem>>, vector<1x64xf32>
    %20 = arith.mulf %18, %18 : vector<8x64xf32>
    %cst_11 = arith.constant dense<0.000000e+00> : vector<8xf32>
    %21 = vector.multi_reduction <add>, %20, %cst_11 [1] : vector<8x64xf32> to vector<8xf32>
    %22 = vector.shape_cast %21 : vector<8xf32> to vector<8x1xf32>
    %cst_12 = arith.constant 6.400000e+01 : f32
    %23 = vector.broadcast %cst_12 : f32 to vector<8x1xf32>
    %24 = arith.divf %22, %23 : vector<8x1xf32>
    %cst_13 = arith.constant 9.99999997E-7 : f32
    %25 = vector.broadcast %cst_13 : f32 to vector<8x1xf32>
    %26 = arith.addf %24, %25 : vector<8x1xf32>
    %27 = math.rsqrt %26 : vector<8x1xf32>
    %28 = vector.broadcast %27 : vector<8x1xf32> to vector<8x64xf32>
    %29 = arith.mulf %18, %28 : vector<8x64xf32>
    %30 = vector.broadcast %19 : vector<1x64xf32> to vector<8x64xf32>
    %31 = arith.mulf %29, %30 : vector<8x64xf32>
    %32 = vector.extract_strided_slice %3 {offsets = [0, 128], sizes = [8, 64], strides = [1, 1]} : vector<8x192xf32> to vector<8x64xf32>
    %c0_14 = arith.constant 0 : index
    %c0_15 = arith.constant 0 : index
    %33 = vector.load %arg5[%c0_14, %c0_15] : memref<8x16xf32, #tpu.memory_space<vmem>>, vector<8x16xf32>
    %c0_16 = arith.constant 0 : index
    %c0_17 = arith.constant 0 : index
    %34 = vector.load %arg6[%c0_16, %c0_17] : memref<8x16xf32, #tpu.memory_space<vmem>>, vector<8x16xf32>
    %c0_18 = arith.constant 0 : index
    %c0_19 = arith.constant 0 : index
    %35 = vector.load %arg7[%c0_18, %c0_19] : memref<64x128xf32, #tpu.memory_space<vmem>>, vector<64x128xf32>
    %36 = vector.extract_strided_slice %17 {offsets = [0, 0], sizes = [8, 16], strides = [1, 1]} : vector<8x64xf32> to vector<8x16xf32>
    %37 = vector.extract_strided_slice %36 {offsets = [0, 8], sizes = [8, 8], strides = [1, 1]} : vector<8x16xf32> to vector<8x8xf32>
    %38 = vector.extract_strided_slice %36 {offsets = [0, 0], sizes = [8, 8], strides = [1, 1]} : vector<8x16xf32> to vector<8x8xf32>
    %39 = tpu.concatenate %37, %38 in 1 : vector<8x8xf32>, vector<8x8xf32> -> vector<8x16xf32>
    %40 = arith.mulf %36, %33 : vector<8x16xf32>
    %41 = arith.mulf %39, %34 : vector<8x16xf32>
    %42 = arith.addf %40, %41 : vector<8x16xf32>
    %43 = vector.extract_strided_slice %31 {offsets = [0, 0], sizes = [8, 16], strides = [1, 1]} : vector<8x64xf32> to vector<8x16xf32>
    %44 = vector.extract_strided_slice %43 {offsets = [0, 8], sizes = [8, 8], strides = [1, 1]} : vector<8x16xf32> to vector<8x8xf32>
    %45 = vector.extract_strided_slice %43 {offsets = [0, 0], sizes = [8, 8], strides = [1, 1]} : vector<8x16xf32> to vector<8x8xf32>
    %46 = tpu.concatenate %44, %45 in 1 : vector<8x8xf32>, vector<8x8xf32> -> vector<8x16xf32>
    %47 = arith.mulf %43, %33 : vector<8x16xf32>
    %48 = arith.mulf %46, %34 : vector<8x16xf32>
    %49 = arith.addf %47, %48 : vector<8x16xf32>
    %50 = vector.extract_strided_slice %32 {offsets = [0, 0], sizes = [8, 16], strides = [1, 1]} : vector<8x64xf32> to vector<8x16xf32>
    %cst_20 = arith.constant dense<0.000000e+00> : vector<8x8xf32>
    %51 = tpu.matmul %42, %49, %cst_20 {dimension_numbers = #tpu.dot_dimension_numbers<[1], [1], [0], [0], [0, 0, 1, 0], [], []>} : vector<8x16xf32>, vector<8x16xf32>, vector<8x8xf32> -> vector<8x8xf32>
    %cst_21 = arith.constant dense<0xFF800000> : vector<8xf32>
    %52 = vector.multi_reduction <maximumf>, %51, %cst_21 [1] : vector<8x8xf32> to vector<8xf32>
    %53 = vector.shape_cast %52 : vector<8xf32> to vector<8x1xf32>
    %54 = vector.broadcast %53 : vector<8x1xf32> to vector<8x8xf32>
    %55 = arith.subf %51, %54 : vector<8x8xf32>
    %56 = math.exp %55 : vector<8x8xf32>
    %cst_22 = arith.constant dense<0.000000e+00> : vector<8xf32>
    %57 = vector.multi_reduction <add>, %56, %cst_22 [1] : vector<8x8xf32> to vector<8xf32>
    %58 = vector.shape_cast %57 : vector<8xf32> to vector<8x1xf32>
    %cst_23 = arith.constant dense<0.000000e+00> : vector<8x16xf32>
    %59 = tpu.matmul %56, %50, %cst_23 {dimension_numbers = #tpu.dot_dimension_numbers<[1], [0], [0], [1], [0, 0, 1, 1], [], []>} : vector<8x8xf32>, vector<8x16xf32>, vector<8x16xf32> -> vector<8x16xf32>
    %60 = vector.broadcast %58 : vector<8x1xf32> to vector<8x16xf32>
    %61 = arith.divf %59, %60 : vector<8x16xf32>
    %62 = vector.extract_strided_slice %35 {offsets = [0, 0], sizes = [16, 128], strides = [1, 1]} : vector<64x128xf32> to vector<16x128xf32>
    %cst_24 = arith.constant dense<0.000000e+00> : vector<8x128xf32>
    %63 = tpu.matmul %61, %62, %cst_24 {dimension_numbers = #tpu.dot_dimension_numbers<[1], [0], [0], [1], [0, 0, 1, 1], [], []>} : vector<8x16xf32>, vector<16x128xf32>, vector<8x128xf32> -> vector<8x128xf32>
    %64 = vector.extract_strided_slice %17 {offsets = [0, 16], sizes = [8, 16], strides = [1, 1]} : vector<8x64xf32> to vector<8x16xf32>
    %65 = vector.extract_strided_slice %64 {offsets = [0, 8], sizes = [8, 8], strides = [1, 1]} : vector<8x16xf32> to vector<8x8xf32>
    %66 = vector.extract_strided_slice %64 {offsets = [0, 0], sizes = [8, 8], strides = [1, 1]} : vector<8x16xf32> to vector<8x8xf32>
    %67 = tpu.concatenate %65, %66 in 1 : vector<8x8xf32>, vector<8x8xf32> -> vector<8x16xf32>
    %68 = arith.mulf %64, %33 : vector<8x16xf32>
    %69 = arith.mulf %67, %34 : vector<8x16xf32>
    %70 = arith.addf %68, %69 : vector<8x16xf32>
    %71 = vector.extract_strided_slice %31 {offsets = [0, 16], sizes = [8, 16], strides = [1, 1]} : vector<8x64xf32> to vector<8x16xf32>
    %72 = vector.extract_strided_slice %71 {offsets = [0, 8], sizes = [8, 8], strides = [1, 1]} : vector<8x16xf32> to vector<8x8xf32>
    %73 = vector.extract_strided_slice %71 {offsets = [0, 0], sizes = [8, 8], strides = [1, 1]} : vector<8x16xf32> to vector<8x8xf32>
    %74 = tpu.concatenate %72, %73 in 1 : vector<8x8xf32>, vector<8x8xf32> -> vector<8x16xf32>
    %75 = arith.mulf %71, %33 : vector<8x16xf32>
    %76 = arith.mulf %74, %34 : vector<8x16xf32>
    %77 = arith.addf %75, %76 : vector<8x16xf32>
    %78 = vector.extract_strided_slice %32 {offsets = [0, 16], sizes = [8, 16], strides = [1, 1]} : vector<8x64xf32> to vector<8x16xf32>
    %cst_25 = arith.constant dense<0.000000e+00> : vector<8x8xf32>
    %79 = tpu.matmul %70, %77, %cst_25 {dimension_numbers = #tpu.dot_dimension_numbers<[1], [1], [0], [0], [0, 0, 1, 0], [], []>} : vector<8x16xf32>, vector<8x16xf32>, vector<8x8xf32> -> vector<8x8xf32>
    %cst_26 = arith.constant dense<0xFF800000> : vector<8xf32>
    %80 = vector.multi_reduction <maximumf>, %79, %cst_26 [1] : vector<8x8xf32> to vector<8xf32>
    %81 = vector.shape_cast %80 : vector<8xf32> to vector<8x1xf32>
    %82 = vector.broadcast %81 : vector<8x1xf32> to vector<8x8xf32>
    %83 = arith.subf %79, %82 : vector<8x8xf32>
    %84 = math.exp %83 : vector<8x8xf32>
    %cst_27 = arith.constant dense<0.000000e+00> : vector<8xf32>
    %85 = vector.multi_reduction <add>, %84, %cst_27 [1] : vector<8x8xf32> to vector<8xf32>
    %86 = vector.shape_cast %85 : vector<8xf32> to vector<8x1xf32>
    %cst_28 = arith.constant dense<0.000000e+00> : vector<8x16xf32>
    %87 = tpu.matmul %84, %78, %cst_28 {dimension_numbers = #tpu.dot_dimension_numbers<[1], [0], [0], [1], [0, 0, 1, 1], [], []>} : vector<8x8xf32>, vector<8x16xf32>, vector<8x16xf32> -> vector<8x16xf32>
    %88 = vector.broadcast %86 : vector<8x1xf32> to vector<8x16xf32>
    %89 = arith.divf %87, %88 : vector<8x16xf32>
    %90 = vector.extract_strided_slice %35 {offsets = [16, 0], sizes = [16, 128], strides = [1, 1]} : vector<64x128xf32> to vector<16x128xf32>
    %cst_29 = arith.constant dense<0.000000e+00> : vector<8x128xf32>
    %91 = tpu.matmul %89, %90, %cst_29 {dimension_numbers = #tpu.dot_dimension_numbers<[1], [0], [0], [1], [0, 0, 1, 1], [], []>} : vector<8x16xf32>, vector<16x128xf32>, vector<8x128xf32> -> vector<8x128xf32>
    %92 = arith.addf %63, %91 : vector<8x128xf32>
    %93 = vector.extract_strided_slice %17 {offsets = [0, 32], sizes = [8, 16], strides = [1, 1]} : vector<8x64xf32> to vector<8x16xf32>
    %94 = vector.extract_strided_slice %93 {offsets = [0, 8], sizes = [8, 8], strides = [1, 1]} : vector<8x16xf32> to vector<8x8xf32>
    %95 = vector.extract_strided_slice %93 {offsets = [0, 0], sizes = [8, 8], strides = [1, 1]} : vector<8x16xf32> to vector<8x8xf32>
    %96 = tpu.concatenate %94, %95 in 1 : vector<8x8xf32>, vector<8x8xf32> -> vector<8x16xf32>
    %97 = arith.mulf %93, %33 : vector<8x16xf32>
    %98 = arith.mulf %96, %34 : vector<8x16xf32>
    %99 = arith.addf %97, %98 : vector<8x16xf32>
    %100 = vector.extract_strided_slice %31 {offsets = [0, 32], sizes = [8, 16], strides = [1, 1]} : vector<8x64xf32> to vector<8x16xf32>
    %101 = vector.extract_strided_slice %100 {offsets = [0, 8], sizes = [8, 8], strides = [1, 1]} : vector<8x16xf32> to vector<8x8xf32>
    %102 = vector.extract_strided_slice %100 {offsets = [0, 0], sizes = [8, 8], strides = [1, 1]} : vector<8x16xf32> to vector<8x8xf32>
    %103 = tpu.concatenate %101, %102 in 1 : vector<8x8xf32>, vector<8x8xf32> -> vector<8x16xf32>
    %104 = arith.mulf %100, %33 : vector<8x16xf32>
    %105 = arith.mulf %103, %34 : vector<8x16xf32>
    %106 = arith.addf %104, %105 : vector<8x16xf32>
    %107 = vector.extract_strided_slice %32 {offsets = [0, 32], sizes = [8, 16], strides = [1, 1]} : vector<8x64xf32> to vector<8x16xf32>
    %cst_30 = arith.constant dense<0.000000e+00> : vector<8x8xf32>
    %108 = tpu.matmul %99, %106, %cst_30 {dimension_numbers = #tpu.dot_dimension_numbers<[1], [1], [0], [0], [0, 0, 1, 0], [], []>} : vector<8x16xf32>, vector<8x16xf32>, vector<8x8xf32> -> vector<8x8xf32>
    %cst_31 = arith.constant dense<0xFF800000> : vector<8xf32>
    %109 = vector.multi_reduction <maximumf>, %108, %cst_31 [1] : vector<8x8xf32> to vector<8xf32>
    %110 = vector.shape_cast %109 : vector<8xf32> to vector<8x1xf32>
    %111 = vector.broadcast %110 : vector<8x1xf32> to vector<8x8xf32>
    %112 = arith.subf %108, %111 : vector<8x8xf32>
    %113 = math.exp %112 : vector<8x8xf32>
    %cst_32 = arith.constant dense<0.000000e+00> : vector<8xf32>
    %114 = vector.multi_reduction <add>, %113, %cst_32 [1] : vector<8x8xf32> to vector<8xf32>
    %115 = vector.shape_cast %114 : vector<8xf32> to vector<8x1xf32>
    %cst_33 = arith.constant dense<0.000000e+00> : vector<8x16xf32>
    %116 = tpu.matmul %113, %107, %cst_33 {dimension_numbers = #tpu.dot_dimension_numbers<[1], [0], [0], [1], [0, 0, 1, 1], [], []>} : vector<8x8xf32>, vector<8x16xf32>, vector<8x16xf32> -> vector<8x16xf32>
    %117 = vector.broadcast %115 : vector<8x1xf32> to vector<8x16xf32>
    %118 = arith.divf %116, %117 : vector<8x16xf32>
    %119 = vector.extract_strided_slice %35 {offsets = [32, 0], sizes = [16, 128], strides = [1, 1]} : vector<64x128xf32> to vector<16x128xf32>
    %cst_34 = arith.constant dense<0.000000e+00> : vector<8x128xf32>
    %120 = tpu.matmul %118, %119, %cst_34 {dimension_numbers = #tpu.dot_dimension_numbers<[1], [0], [0], [1], [0, 0, 1, 1], [], []>} : vector<8x16xf32>, vector<16x128xf32>, vector<8x128xf32> -> vector<8x128xf32>
    %121 = arith.addf %92, %120 : vector<8x128xf32>
    %122 = vector.extract_strided_slice %17 {offsets = [0, 48], sizes = [8, 16], strides = [1, 1]} : vector<8x64xf32> to vector<8x16xf32>
    %123 = vector.extract_strided_slice %122 {offsets = [0, 8], sizes = [8, 8], strides = [1, 1]} : vector<8x16xf32> to vector<8x8xf32>
    %124 = vector.extract_strided_slice %122 {offsets = [0, 0], sizes = [8, 8], strides = [1, 1]} : vector<8x16xf32> to vector<8x8xf32>
    %125 = tpu.concatenate %123, %124 in 1 : vector<8x8xf32>, vector<8x8xf32> -> vector<8x16xf32>
    %126 = arith.mulf %122, %33 : vector<8x16xf32>
    %127 = arith.mulf %125, %34 : vector<8x16xf32>
    %128 = arith.addf %126, %127 : vector<8x16xf32>
    %129 = vector.extract_strided_slice %31 {offsets = [0, 48], sizes = [8, 16], strides = [1, 1]} : vector<8x64xf32> to vector<8x16xf32>
    %130 = vector.extract_strided_slice %129 {offsets = [0, 8], sizes = [8, 8], strides = [1, 1]} : vector<8x16xf32> to vector<8x8xf32>
    %131 = vector.extract_strided_slice %129 {offsets = [0, 0], sizes = [8, 8], strides = [1, 1]} : vector<8x16xf32> to vector<8x8xf32>
    %132 = tpu.concatenate %130, %131 in 1 : vector<8x8xf32>, vector<8x8xf32> -> vector<8x16xf32>
    %133 = arith.mulf %129, %33 : vector<8x16xf32>
    %134 = arith.mulf %132, %34 : vector<8x16xf32>
    %135 = arith.addf %133, %134 : vector<8x16xf32>
    %136 = vector.extract_strided_slice %32 {offsets = [0, 48], sizes = [8, 16], strides = [1, 1]} : vector<8x64xf32> to vector<8x16xf32>
    %cst_35 = arith.constant dense<0.000000e+00> : vector<8x8xf32>
    %137 = tpu.matmul %128, %135, %cst_35 {dimension_numbers = #tpu.dot_dimension_numbers<[1], [1], [0], [0], [0, 0, 1, 0], [], []>} : vector<8x16xf32>, vector<8x16xf32>, vector<8x8xf32> -> vector<8x8xf32>
    %cst_36 = arith.constant dense<0xFF800000> : vector<8xf32>
    %138 = vector.multi_reduction <maximumf>, %137, %cst_36 [1] : vector<8x8xf32> to vector<8xf32>
    %139 = vector.shape_cast %138 : vector<8xf32> to vector<8x1xf32>
    %140 = vector.broadcast %139 : vector<8x1xf32> to vector<8x8xf32>
    %141 = arith.subf %137, %140 : vector<8x8xf32>
    %142 = math.exp %141 : vector<8x8xf32>
    %cst_37 = arith.constant dense<0.000000e+00> : vector<8xf32>
    %143 = vector.multi_reduction <add>, %142, %cst_37 [1] : vector<8x8xf32> to vector<8xf32>
    %144 = vector.shape_cast %143 : vector<8xf32> to vector<8x1xf32>
    %cst_38 = arith.constant dense<0.000000e+00> : vector<8x16xf32>
    %145 = tpu.matmul %142, %136, %cst_38 {dimension_numbers = #tpu.dot_dimension_numbers<[1], [0], [0], [1], [0, 0, 1, 1], [], []>} : vector<8x8xf32>, vector<8x16xf32>, vector<8x16xf32> -> vector<8x16xf32>
    %146 = vector.broadcast %144 : vector<8x1xf32> to vector<8x16xf32>
    %147 = arith.divf %145, %146 : vector<8x16xf32>
    %148 = vector.extract_strided_slice %35 {offsets = [48, 0], sizes = [16, 128], strides = [1, 1]} : vector<64x128xf32> to vector<16x128xf32>
    %cst_39 = arith.constant dense<0.000000e+00> : vector<8x128xf32>
    %149 = tpu.matmul %147, %148, %cst_39 {dimension_numbers = #tpu.dot_dimension_numbers<[1], [0], [0], [1], [0, 0, 1, 1], [], []>} : vector<8x16xf32>, vector<16x128xf32>, vector<8x128xf32> -> vector<8x128xf32>
    %150 = arith.addf %121, %149 : vector<8x128xf32>
    %c0_40 = arith.constant 0 : index
    %c0_41 = arith.constant 0 : index
    %c0_42 = arith.constant 0 : index
    %151 = vector.load %arg8[%c0_40, %c0_41, %c0_42] : memref<1x8x128xf32, #tpu.memory_space<vmem>>, vector<1x8x128xf32>
    %152 = vector.shape_cast %151 : vector<1x8x128xf32> to vector<8x128xf32>
    %153 = vector.shape_cast %150 : vector<8x128xf32> to vector<1x8x128xf32>
    tpu.vector_store %arg8[%c0_40, %c0_41, %c0_42], %153 {strides = array<i32>} : memref<1x8x128xf32, #tpu.memory_space<vmem>>, vector<1x8x128xf32>,
    return
  }
  func.func @transform_0(%arg0: i32) -> (i32, i32, i32) {
    %c0_i32 = arith.constant 0 : i32
    %c0_i32_0 = arith.constant 0 : i32
    %c0_i32_1 = arith.constant 0 : i32
    return %arg0, %c0_i32, %c0_i32_0 : i32, i32, i32
  }
  func.func @transform_1(%arg0: i32) -> (i32, i32) {
    %c0_i32 = arith.constant 0 : i32
    %c0_i32_0 = arith.constant 0 : i32
    %c0_i32_1 = arith.constant 0 : i32
    return %c0_i32, %c0_i32_0 : i32, i32
  }
  func.func @transform_2(%arg0: i32) -> (i32, i32) {
    %c0_i32 = arith.constant 0 : i32
    %c0_i32_0 = arith.constant 0 : i32
    %c0_i32_1 = arith.constant 0 : i32
    return %c0_i32, %c0_i32_0 : i32, i32
  }
  func.func @transform_3(%arg0: i32) -> (i32, i32) {
    %c0_i32 = arith.constant 0 : i32
    %c0_i32_0 = arith.constant 0 : i32
    %c0_i32_1 = arith.constant 0 : i32
    return %c0_i32, %c0_i32_0 : i32, i32
  }
  func.func @transform_4(%arg0: i32) -> (i32, i32) {
    %c0_i32 = arith.constant 0 : i32
    %c0_i32_0 = arith.constant 0 : i32
    %c0_i32_1 = arith.constant 0 : i32
    return %c0_i32, %c0_i32_0 : i32, i32
  }
  func.func @transform_5(%arg0: i32) -> (i32, i32) {
    %c0_i32 = arith.constant 0 : i32
    %c0_i32_0 = arith.constant 0 : i32
    %c0_i32_1 = arith.constant 0 : i32
    return %c0_i32, %c0_i32_0 : i32, i32
  }
  func.func @transform_6(%arg0: i32) -> (i32, i32) {
    %c0_i32 = arith.constant 0 : i32
    %c0_i32_0 = arith.constant 0 : i32
    %c0_i32_1 = arith.constant 0 : i32
    return %c0_i32, %c0_i32_0 : i32, i32
  }
  func.func @transform_7(%arg0: i32) -> (i32, i32, i32) {
    %c0_i32 = arith.constant 0 : i32
    %c0_i32_0 = arith.constant 0 : i32
    %c0_i32_1 = arith.constant 0 : i32
    return %arg0, %c0_i32, %c0_i32_0 : i32, i32, i32
  }
}

</mosaic_0001>

<llo_original>
// kernel: tpu_custom_call.1
$region0: #{tpu_custom_call.1}
  #allocation0 [shape = 'u32[]', space=smem, size = 0x4, offset = 0x4, fixed_abs, tag = 'smem constant byte address 0x4 - core index']
  #allocation1 [shape = 'u32[144,128]{1,0:T(1,128)}', space=vmem, size = 0x12000, scoped, tag = 'internal scratch']
  %s0 = inlined_call_operand.hbm [shape: f32[2,8,32], index: 0, kind: input, shape index: {}]
  %s1 = inlined_call_operand.hbm [shape: f32[32,192], index: 1, kind: input, shape index: {}]
  %s2 = inlined_call_operand.vmem [shape: f32[1,64], index: 2, kind: input, shape index: {}]
  %s3 = inlined_call_operand.hbm [shape: f32[1,64], index: 3, kind: input, shape index: {}]
  %s4 = inlined_call_operand.hbm [shape: f32[8,16], index: 4, kind: input, shape index: {}]
  %s5 = inlined_call_operand.vmem [shape: f32[8,16], index: 5, kind: input, shape index: {}]
  %s6 = inlined_call_operand.hbm [shape: f32[64,128], index: 6, kind: input, shape index: {}]
  %s7 = inlined_call_operand.hbm [shape: f32[2,8,128], index: 7, kind: output, shape index: {}]
  %s8 = sld [smem:[#allocation0]]
  $region81: #{tpu_custom_call.1} parent=0
    _
  %s10 = ssub.s32 1, %s8
  %s11 = scalar_select 0, %s10, %s8
  $region1: #{tpu_custom_call.1} parent=0
    #allocation2 [shape = 'u8[8192]{0}', space=vmem, size = 0x2000, scoped, tag = 'input window, operand 0']
    #allocation3 [shape = 's32[2]{0}', space=sflag, size = 0x8, scoped, tag = 'scoped memory for tpu_custom_call.1']
    #allocation4 [shape = 's32[2]{0}', space=sflag, size = 0x8, scoped, tag = 'scoped memory for tpu_custom_call.1']
    #allocation5 [shape = 'u8[32768]{0}', space=vmem, size = 0x8000, scoped, tag = 'input window, operand 1, single buffered']
    #allocation6 [shape = 's32[1]{0}', space=sflag, size = 0x4, scoped, tag = 'scoped memory for tpu_custom_call.1']
    #allocation7 [shape = 'u8[512]{0}', space=vmem, size = 0x400, scoped, tag = 'input window, operand 3, single buffered']
    #allocation8 [shape = 'u8[4096]{0}', space=vmem, size = 0x1000, scoped, tag = 'input window, operand 4, single buffered']
    #allocation9 [shape = 's32[1]{0}', space=sflag, size = 0x4, scoped, tag = 'scoped memory for tpu_custom_call.1']
    #allocation10 [shape = 'u8[32768]{0}', space=vmem, size = 0x8000, scoped, tag = 'input window, operand 6, single buffered']
    #allocation11 [shape = 'u8[8192]{0}', space=vmem, size = 0x2000, scoped, tag = 'output window, operand 0']
    %12 = vsyncpa [#allocation3], 0
    %s13 = scalar_lea.sflag [#allocation3], 1
    %14 = vsyncpa %s13, 0
    %15 = vsyncpa [#allocation6], 0
    %16 = vsyncpa [#allocation9], 0
    %17 = vsyncpa [#allocation4], 0
    %s18 = scalar_lea.sflag [#allocation4], 1
    %19 = vsyncpa %s18, 0
    loop: start=0, step=1, limit=4
    $region2: #{tpu_custom_call.1} parent=1 // loop_pre_header
      _
    $region3: #{tpu_custom_call.1} parent=1 // loop_header
      %s21 = sphi 0, %s25
      %p22 = scmp.ge.s32.totalorder %s21, 4
      %s31 = sphi 0, %s33
      %s34 = sphi 0, %s31
      %s35 = sphi 0, %s34
      %s51 = sphi 0, %s35
      %s55 = sphi 0, %s55
      %s57 = sphi 0, %s55
      %s58 = sphi 0, %s57
      %s72 = sphi 0, %s58
      %s76 = sphi 0, %s76
      %s78 = sphi 0, %s76
      %s79 = sphi 0, %s78
      %s93 = sphi 0, %s79
      %s97 = sphi 0, %s97
      %s99 = sphi 0, %s97
      %s100 = sphi 0, %s99
      %s114 = sphi 0, %s100
      %s118 = sphi 0, %s118
      %s120 = sphi 0, %s118
      %s121 = sphi 0, %s120
      %s135 = sphi 0, %s121
      %s139 = sphi 0, %s139
      %s141 = sphi 0, %s139
      %s142 = sphi 0, %s141
      %s156 = sphi 0, %s142
      %s160 = sphi 0, %s160
      %s162 = sphi 0, %s160
      %s163 = sphi 0, %s162
      %s177 = sphi 0, %s163
      %s183 = sphi 0, %s185
      %s186 = sphi 0, %s183
      %s187 = sphi 0, %s186
      %s203 = sphi 0, %s187
    $region4: #{tpu_custom_call.1} parent=1 // loop_header_branch
      %24 = sbr.rel (%p22) target = $region8
    $region5: #{tpu_custom_call.1} parent=1 // loop_body
      %s26 = ssub.s32 %s21, 1
      %s27 = ssub.s32 %s21, 2
      %s28 = sadd.s32 %s21, 1
      %s29 = ssub.s32 %s21, %s28
      %p30 = scmp.eq.s32.totalorder %s29, 0
      %s32 = sadd.s32 %s31, 1
      %s33 = scalar_select %p30, %s31, %s32
      %p36 = pneg %p30
      %p37 = scmp.eq.s32.totalorder %s21, 1
      %p38 = por %p36, %p37
      %p39 = scmp.ne.s32.totalorder %s31, %s34
      %p40 = scmp.eq.s32.totalorder %s21, 0
      %p41 = por %p39, %p40
      %p42 = scmp.ne.s32.totalorder %s31, %s34
      %p43 = scmp.eq.s32.totalorder %s26, 1
      %p44 = por %p42, %p43
      %p45 = scmp.ne.s32.totalorder %s34, %s35
      %p46 = scmp.eq.s32.totalorder %s26, 0
      %p47 = por %p45, %p46
      %p48 = scmp.ne.s32.totalorder %s34, %s35
      %p49 = scmp.eq.s32.totalorder %s27, 1
      %p50 = por %p48, %p49
      %p52 = scmp.ne.s32.totalorder %s35, %s51
      %p53 = scmp.eq.s32.totalorder %s27, 0
      %p54 = por %p52, %p53
      %s56 = sadd.s32 %s55, 1
      %p59 = scmp.eq.s32.totalorder %s21, 1
      %p60 = scmp.ne.s32.totalorder %s55, %s57
      %p61 = scmp.eq.s32.totalorder %s21, 0
      %p62 = por %p60, %p61
      %p63 = scmp.ne.s32.totalorder %s55, %s57
      %p64 = scmp.eq.s32.totalorder %s26, 1
      %p65 = por %p63, %p64
      %p66 = scmp.ne.s32.totalorder %s57, %s58
      %p67 = scmp.eq.s32.totalorder %s26, 0
      %p68 = por %p66, %p67
      %p69 = scmp.ne.s32.totalorder %s57, %s58
      %p70 = scmp.eq.s32.totalorder %s27, 1
      %p71 = por %p69, %p70
      %p73 = scmp.ne.s32.totalorder %s58, %s72
      %p74 = scmp.eq.s32.totalorder %s27, 0
      %p75 = por %p73, %p74
      %s77 = sadd.s32 %s76, 1
      %p80 = scmp.eq.s32.totalorder %s21, 1
      %p81 = scmp.ne.s32.totalorder %s76, %s78
      %p82 = scmp.eq.s32.totalorder %s21, 0
      %p83 = por %p81, %p82
      %p84 = scmp.ne.s32.totalorder %s76, %s78
      %p85 = scmp.eq.s32.totalorder %s26, 1
      %p86 = por %p84, %p85
      %p87 = scmp.ne.s32.totalorder %s78, %s79
      %p88 = scmp.eq.s32.totalorder %s26, 0
      %p89 = por %p87, %p88
      %p90 = scmp.ne.s32.totalorder %s78, %s79
      %p91 = scmp.eq.s32.totalorder %s27, 1
      %p92 = por %p90, %p91
      %p94 = scmp.ne.s32.totalorder %s79, %s93
      %p95 = scmp.eq.s32.totalorder %s27, 0
      %p96 = por %p94, %p95
      %s98 = sadd.s32 %s97, 1
      %p101 = scmp.eq.s32.totalorder %s21, 1
      %p102 = scmp.ne.s32.totalorder %s97, %s99
      %p103 = scmp.eq.s32.totalorder %s21, 0
      %p104 = por %p102, %p103
      %p105 = scmp.ne.s32.totalorder %s97, %s99
      %p106 = scmp.eq.s32.totalorder %s26, 1
      %p107 = por %p105, %p106
      %p108 = scmp.ne.s32.totalorder %s99, %s100
      %p109 = scmp.eq.s32.totalorder %s26, 0
      %p110 = por %p108, %p109
      %p111 = scmp.ne.s32.totalorder %s99, %s100
      %p112 = scmp.eq.s32.totalorder %s27, 1
      %p113 = por %p111, %p112
      %p115 = scmp.ne.s32.totalorder %s100, %s114
      %p116 = scmp.eq.s32.totalorder %s27, 0
      %p117 = por %p115, %p116
      %s119 = sadd.s32 %s118, 1
      %p122 = scmp.eq.s32.totalorder %s21, 1
      %p123 = scmp.ne.s32.totalorder %s118, %s120
      %p124 = scmp.eq.s32.totalorder %s21, 0
      %p125 = por %p123, %p124
      %p126 = scmp.ne.s32.totalorder %s118, %s120
      %p127 = scmp.eq.s32.totalorder %s26, 1
      %p128 = por %p126, %p127
      %p129 = scmp.ne.s32.totalorder %s120, %s121
      %p130 = scmp.eq.s32.totalorder %s26, 0
      %p131 = por %p129, %p130
      %p132 = scmp.ne.s32.totalorder %s120, %s121
      %p133 = scmp.eq.s32.totalorder %s27, 1
      %p134 = por %p132, %p133
      %p136 = scmp.ne.s32.totalorder %s121, %s135
      %p137 = scmp.eq.s32.totalorder %s27, 0
      %p138 = por %p136, %p137
      %s140 = sadd.s32 %s139, 1
      %p143 = scmp.eq.s32.totalorder %s21, 1
      %p144 = scmp.ne.s32.totalorder %s139, %s141
      %p145 = scmp.eq.s32.totalorder %s21, 0
      %p146 = por %p144, %p145
      %p147 = scmp.ne.s32.totalorder %s139, %s141
      %p148 = scmp.eq.s32.totalorder %s26, 1
      %p149 = por %p147, %p148
      %p150 = scmp.ne.s32.totalorder %s141, %s142
      %p151 = scmp.eq.s32.totalorder %s26, 0
      %p152 = por %p150, %p151
      %p153 = scmp.ne.s32.totalorder %s141, %s142
      %p154 = scmp.eq.s32.totalorder %s27, 1
      %p155 = por %p153, %p154
      %p157 = scmp.ne.s32.totalorder %s142, %s156
      %p158 = scmp.eq.s32.totalorder %s27, 0
      %p159 = por %p157, %p158
      %s161 = sadd.s32 %s160, 1
      %p164 = scmp.eq.s32.totalorder %s21, 1
      %p165 = scmp.ne.s32.totalorder %s160, %s162
      %p166 = scmp.eq.s32.totalorder %s21, 0
      %p167 = por %p165, %p166
      %p168 = scmp.ne.s32.totalorder %s160, %s162
      %p169 = scmp.eq.s32.totalorder %s26, 1
      %p170 = por %p168, %p169
      %p171 = scmp.ne.s32.totalorder %s162, %s163
      %p172 = scmp.eq.s32.totalorder %s26, 0
      %p173 = por %p171, %p172
      %p174 = scmp.ne.s32.totalorder %s162, %s163
      %p175 = scmp.eq.s32.totalorder %s27, 1
      %p176 = por %p174, %p175
      %p178 = scmp.ne.s32.totalorder %s163, %s177
      %p179 = scmp.eq.s32.totalorder %s27, 0
      %p180 = por %p178, %p179
      %s181 = ssub.s32 %s21, %s28
      %p182 = scmp.eq.s32.totalorder %s181, 0
      %s184 = sadd.s32 %s183, 1
      %s185 = scalar_select %p182, %s183, %s184
      %p188 = pneg %p182
      %p189 = scmp.eq.s32.totalorder %s21, 1
      %p190 = por %p188, %p189
      %p191 = scmp.ne.s32.totalorder %s183, %s186
      %p192 = scmp.eq.s32.totalorder %s21, 0
      %p193 = por %p191, %p192
      %p194 = scmp.ne.s32.totalorder %s183, %s186
      %p195 = scmp.eq.s32.totalorder %s26, 1
      %p196 = por %p194, %p195
      %p197 = scmp.ne.s32.totalorder %s186, %s187
      %p198 = scmp.eq.s32.totalorder %s26, 0
      %p199 = por %p197, %p198
      %p200 = scmp.ne.s32.totalorder %s186, %s187
      %p201 = scmp.eq.s32.totalorder %s27, 1
      %p202 = por %p200, %p201
      %p204 = scmp.ne.s32.totalorder %s187, %s203
      %p205 = scmp.eq.s32.totalorder %s27, 0
      %p206 = por %p204, %p205
      %p207 = scmp.le.s32.totalorder 1, %s21
      %p208 = scmp.lt.s32.totalorder %s21, 3
      %p209 = pnand %p207, %p208
      %p210 = pneg %p209
      // Predicated region
      $region9: #{tpu_custom_call.1} parent=5 // pred_check
        _
      $region10: #{tpu_custom_call.1} parent=5 // pred_check_branch
        %212 = sbr.rel (%p209) target = $region12
      $region11: #{tpu_custom_call.1} parent=5 // pred_region
        %s213 = ssub.s32 %s21, 1
        // Predicated region
        $region13: #{tpu_custom_call.1} parent=11 // pred_check
          %p214 = pneg %p68
        $region14: #{tpu_custom_call.1} parent=11 // pred_check_branch
          %216 = sbr.rel (%p214) target = $region16
        $region15: #{tpu_custom_call.1} parent=11 // pred_region
          %s218 = ssub.s32 1024, 1024
          %219 = vsyncadd [#allocation6], %s218
          %s220 = sshll.u32 [#allocation5], 4
          %s221 = int_to_ptr.vmem [resolvable:$true] %s220
          %226 = dma.hbm_to_vmem [thread:$0]  %s1, 1024, %s221, [#allocation6], 256, 256, 16
        $region16: #{tpu_custom_call.1} parent=11 // pred_fallthru
          _
        // Predicated region
        $region17: #{tpu_custom_call.1} parent=11 // pred_check
          %p227 = pneg %p89
        $region18: #{tpu_custom_call.1} parent=11 // pred_check_branch
          %229 = sbr.rel (%p227) target = $region20
        $region19: #{tpu_custom_call.1} parent=11 // pred_region
          _
        $region20: #{tpu_custom_call.1} parent=11 // pred_fallthru
          _
        // Predicated region
        $region21: #{tpu_custom_call.1} parent=11 // pred_check
          %p230 = pneg %p110
        $region22: #{tpu_custom_call.1} parent=11 // pred_check_branch
          %232 = sbr.rel (%p230) target = $region24
        $region23: #{tpu_custom_call.1} parent=11 // pred_region
          %s234 = ssub.s32 16, 16
          %235 = vsyncadd [#allocation6], %s234
          %s237 = sshll.u32 [#allocation7], 4
          %s238 = int_to_ptr.vmem [resolvable:$true] %s237
          %240 = dma.hbm_to_vmem [thread:$0]  %s3, 16, %s238, [#allocation6]
        $region24: #{tpu_custom_call.1} parent=11 // pred_fallthru
          _
        // Predicated region
        $region25: #{tpu_custom_call.1} parent=11 // pred_check
          %p241 = pneg %p131
        $region26: #{tpu_custom_call.1} parent=11 // pred_check_branch
          %243 = sbr.rel (%p241) target = $region28
        $region27: #{tpu_custom_call.1} parent=11 // pred_region
          %s245 = ssub.s32 128, 128
          %246 = vsyncadd [#allocation9], %s245
          %s248 = sshll.u32 [#allocation8], 4
          %s249 = int_to_ptr.vmem [resolvable:$true] %s248
          %251 = dma.hbm_to_vmem [thread:$0]  %s4, 128, %s249, [#allocation9]
        $region28: #{tpu_custom_call.1} parent=11 // pred_fallthru
          _
        // Predicated region
        $region29: #{tpu_custom_call.1} parent=11 // pred_check
          %p252 = pneg %p152
        $region30: #{tpu_custom_call.1} parent=11 // pred_check_branch
          %254 = sbr.rel (%p252) target = $region32
        $region31: #{tpu_custom_call.1} parent=11 // pred_region
          _
        $region32: #{tpu_custom_call.1} parent=11 // pred_fallthru
          _
        // Predicated region
        $region33: #{tpu_custom_call.1} parent=11 // pred_check
          %p255 = pneg %p173
        $region34: #{tpu_custom_call.1} parent=11 // pred_check_branch
          %257 = sbr.rel (%p255) target = $region36
        $region35: #{tpu_custom_call.1} parent=11 // pred_region
          %s259 = ssub.s32 1024, 1024
          %260 = vsyncadd [#allocation9], %s259
          %s261 = sshll.u32 [#allocation10], 4
          %s262 = int_to_ptr.vmem [resolvable:$true] %s261
          %267 = dma.hbm_to_vmem [thread:$0]  %s6, 1024, %s262, [#allocation9], 128, 128, 8
        $region36: #{tpu_custom_call.1} parent=11 // pred_fallthru
          _
      $region12: #{tpu_custom_call.1} parent=5 // pred_fallthru
        _
      %p268 = scmp.lt.s32.totalorder %s21, 2
      // Predicated region
      $region37: #{tpu_custom_call.1} parent=5 // pred_check
        %p269 = pneg %p268
      $region38: #{tpu_custom_call.1} parent=5 // pred_check_branch
        %271 = sbr.rel (%p269) target = $region40
      $region39: #{tpu_custom_call.1} parent=5 // pred_region
        // Predicated region
        $region41: #{tpu_custom_call.1} parent=39 // pred_check
          %p272 = pneg %p41
        $region42: #{tpu_custom_call.1} parent=39 // pred_check_branch
          %274 = sbr.rel (%p272) target = $region44
        $region43: #{tpu_custom_call.1} parent=39 // pred_region
          %s275 = sand.u32 %s31, 1
          %s276 = scalar_lea.sflag [#allocation3], %s275
          %s277 = sand.u32 %s31, 1
          %s278 = smul.addr %s277, 8
          %s279 = scalar_lea.vmem [#allocation2], %s278
          %s281 = ssub.s32 128, 128
          %282 = vsyncadd %s276, %s281
          %s283 = smul.addr %s21, 128
          %s284 = scalar_lea.hbm %s0, %s283
          %s286 = sshll.u32 %s279, 4
          %s287 = int_to_ptr.vmem [resolvable:$true] %s286
          %289 = dma.hbm_to_vmem [thread:$0]  %s284, 128, %s287, %s276
        $region44: #{tpu_custom_call.1} parent=39 // pred_fallthru
          _
      $region40: #{tpu_custom_call.1} parent=5 // pred_fallthru
        _
      %p290 = scmp.le.s32.totalorder 1, %s21
      %p291 = scmp.lt.s32.totalorder %s21, 3
      %p292 = pnand %p290, %p291
      %p293 = pneg %p292
      // Predicated region
      $region45: #{tpu_custom_call.1} parent=5 // pred_check
        _
      $region46: #{tpu_custom_call.1} parent=5 // pred_check_branch
        %295 = sbr.rel (%p292) target = $region48
      $region47: #{tpu_custom_call.1} parent=5 // pred_region
        %s296 = ssub.s32 %s21, 1
        %s297 = sand.u32 %s34, 1
        %s298 = scalar_lea.sflag [#allocation3], %s297
        %s299 = sand.u32 %s34, 1
        %s300 = smul.addr %s299, 8
        %s301 = scalar_lea.vmem [#allocation2], %s300
        // Predicated region
        $region49: #{tpu_custom_call.1} parent=47 // pred_check
          %p302 = pneg %p47
        $region50: #{tpu_custom_call.1} parent=47 // pred_check_branch
          %304 = sbr.rel (%p302) target = $region52
        $region51: #{tpu_custom_call.1} parent=47 // pred_region
          %305 = dma.done %s298, 128
        $region52: #{tpu_custom_call.1} parent=47 // pred_fallthru
          _
        // Predicated region
        $region53: #{tpu_custom_call.1} parent=47 // pred_check
          %p306 = pneg %p68
        $region54: #{tpu_custom_call.1} parent=47 // pred_check_branch
          %308 = sbr.rel (%p306) target = $region56
        $region55: #{tpu_custom_call.1} parent=47 // pred_region
          %309 = dma.done [#allocation6], 1024
        $region56: #{tpu_custom_call.1} parent=47 // pred_fallthru
          _
        // Predicated region
        $region57: #{tpu_custom_call.1} parent=47 // pred_check
          %p310 = pneg %p110
        $region58: #{tpu_custom_call.1} parent=47 // pred_check_branch
          %312 = sbr.rel (%p310) target = $region60
        $region59: #{tpu_custom_call.1} parent=47 // pred_region
          %313 = dma.done [#allocation6], 16
        $region60: #{tpu_custom_call.1} parent=47 // pred_fallthru
          _
        // Predicated region
        $region61: #{tpu_custom_call.1} parent=47 // pred_check
          %p314 = pneg %p131
        $region62: #{tpu_custom_call.1} parent=47 // pred_check_branch
          %316 = sbr.rel (%p314) target = $region64
        $region63: #{tpu_custom_call.1} parent=47 // pred_region
          %317 = dma.done [#allocation9], 128
        $region64: #{tpu_custom_call.1} parent=47 // pred_fallthru
          _
        // Predicated region
        $region65: #{tpu_custom_call.1} parent=47 // pred_check
          %p318 = pneg %p173
        $region66: #{tpu_custom_call.1} parent=47 // pred_check_branch
          %320 = sbr.rel (%p318) target = $region68
        $region67: #{tpu_custom_call.1} parent=47 // pred_region
          %321 = dma.done [#allocation9], 1024
        $region68: #{tpu_custom_call.1} parent=47 // pred_fallthru
          _
        %s322 = sand.u32 %s34, 1
        %s323 = scalar_lea.sflag [#allocation3], %s322
        %s324 = sand.u32 %s34, 1
        %s325 = smul.addr %s324, 8
        %s326 = scalar_lea.vmem [#allocation2], %s325
        %p327 = pneg %p47
        %p328 = pneg %p44
        %p329 = pneg %p68
        %p330 = pneg %p65
        %p331 = pneg %p89
        %p332 = pneg %p86
        %p333 = pneg %p110
        %p334 = pneg %p107
        %p335 = pneg %p131
        %p336 = pneg %p128
        %p337 = pneg %p152
        %p338 = pneg %p149
        %p339 = pneg %p173
        %p340 = pneg %p170
        %p341 = pneg %p199
        %p342 = pneg %p196
        %s343 = sand.u32 %s186, 1
        %s344 = scalar_lea.sflag [#allocation4], %s343
        %s345 = sand.u32 %s186, 1
        %s346 = smul.addr %s345, 8
        %s347 = scalar_lea.vmem [#allocation11], %s346
        %v348 = vld [vmem:[%s301] sm:$0xff]
        %v349 = vld [vmem:[#allocation5] sm:$0xff]
        %v350 = vld [vmem:[#allocation5 + $0x8] sm:$0xff]
        %v351 = vld [vmem:[#allocation5 + $0x10] sm:$0xff]
        %v352 = vld [vmem:[#allocation5 + $0x18] sm:$0xff]
        %v353 = vld [vmem:[#allocation5 + $0x20] sm:$0xff]
        %v354 = vld [vmem:[#allocation5 + $0x28] sm:$0xff]
        %v355 = vld [vmem:[#allocation5 + $0x30] sm:$0xff]
        %v356 = vld [vmem:[#allocation5 + $0x38] sm:$0xff]
        %vm357 = vcmask 261120
        %v359 = vsel %vm357, %v348, 0
        %361 = vmatprep.subr.mxu0 0.0
        %362 = vmatpush1.msra.mxu0 0.0
        %363 = vmatprep.subr.mxu0 0.0
        %364 = vmatpush1.msra.mxu0 0.0
        %365 = vmatprep.subr.mxu0 0.0
        %366 = vmatpush1.msra.mxu0 0.0
        %367 = vmatprep.subr.mxu0 0.0
        %368 = vmatpush1.msra.mxu0 0.0
        %369 = vmatprep.subr.mxu0 0.0
        %370 = vmatpush1.msra.mxu0 0.0
        %371 = vmatprep.subr.mxu0 0.0
        %372 = vmatpush1.msra.mxu0 0.0
        %373 = vmatprep.subr.mxu0 0.0
        %374 = vmatpush1.msra.mxu0 0.0
        %375 = vmatprep.subr.mxu0 0.0
        %376 = vmatpush1.msra.mxu0 0.0
        %377 = vmatprep.subr.mxu0 0.0
        %378 = vmatpush1.msra.mxu0 0.0
        %379 = vmatprep.subr.mxu0 0.0
        %380 = vmatpush1.msra.mxu0 0.0
        %381 = vmatprep.subr.mxu0 0.0
        %382 = vmatpush1.msra.mxu0 0.0
        %383 = vmatprep.subr.mxu0 0.0
        %384 = vmatpush1.msra.mxu0 0.0
        %385 = vmatprep.subr.mxu0 %v356
        %386 = vmatpush1.msra.mxu0 %v355
        %387 = vmatprep.subr.mxu0 %v354
        %388 = vmatpush1.msra.mxu0 %v353
        %389 = vmatprep.subr.mxu0 %v352
        %390 = vmatpush1.msra.mxu0 %v351
        %391 = vmatprep.subr.mxu0 %v350
        %392 = vmatpush1.msra.mxu0 %v349
        %393 = vmatprep.subr.mxu0 0.0
        %394 = vmatpush2.msra.mxu0 0.0
        %395 = vmatprep.subr.mxu0 0.0
        %396 = vmatpush2.msra.mxu0 0.0
        %397 = vmatprep.subr.mxu0 0.0
        %398 = vmatpush2.msra.mxu0 0.0
        %399 = vmatprep.subr.mxu0 0.0
        %400 = vmatpush2.msra.mxu0 0.0
        %401 = vmatprep.subr.mxu0 0.0
        %402 = vmatpush2.msra.mxu0 0.0
        %403 = vmatprep.subr.mxu0 0.0
        %404 = vmatpush2.msra.mxu0 0.0
        %405 = vmatprep.subr.mxu0 0.0
        %406 = vmatpush2.msra.mxu0 0.0
        %407 = vmatprep.subr.mxu0 0.0
        %408 = vmatpush2.msra.mxu0 0.0
        %409 = vmatprep.subr.mxu0 0.0
        %410 = vmatpush2.msra.mxu0 0.0
        %411 = vmatprep.subr.mxu0 0.0
        %412 = vmatpush2.msra.mxu0 0.0
        %413 = vmatprep.subr.mxu0 0.0
        %414 = vmatpush2.msra.mxu0 0.0
        %415 = vmatprep.subr.mxu0 0.0
        %416 = vmatpush2.msra.mxu0 0.0
        %417 = vmatprep.subr.mxu0 0.0
        %418 = vmatpush2.msra.mxu0 0.0
        %419 = vmatprep.subr.mxu0 0.0
        %420 = vmatpush2.msra.mxu0 0.0
        %421 = vmatprep.subr.mxu0 0.0
        %422 = vmatpush2.msra.mxu0 0.0
        %423 = vmatprep.subr.mxu0 0.0
        %424 = vmatpush2.msra.mxu0 0.0
        %425 = vmatprep.mubr.f32.mxu0 0.0
        %426 = vmatmul.mubr.f32.gmra.mxu0 %v359
        %v427 = vpop.f32.mrf.mxu0
        %v428 = vadd.f32 0.0, %v427
        %v429 = vpop.f32.mrf.mxu0
        %v430 = vadd.f32 0.0, %v429
        %431 = vdwg.mxu0
        %v432 = vld [vmem:[%s2] sm:$0x1]
        %v433 = vmul.f32 %v428, %v428
        %vm434 = vcmask 523264
        %v435 = vsel %vm434, %v433, 0.0
        %436 = vadd.xlane.f32.xlu0 %v435
        %v437 = vpop.xlane.xlu0 %436
        %v438 = vrcp.pop 64.0
        %v439 = vmul.f32 %v437, %v438
        %v440 = vadd.f32 %v439, 1e-06
        %v441 = vrsqrt.pop %v440
        %v442 = vmul.f32 %v428, %v441
        %v444 = vlaneseq
        %v445 = vshrl.u32 %v444, 7
        %v446 = vsub.s32 0, %v445
        %v447 = vrot.slane %v432, %v446
        %v449 = vmul.f32 %v442, %v447
        %v450 = vld [vmem:[#allocation7] sm:$0x1]
        %452 = vrot.lane.b32.xlu0 %v433, 64
        %v453 = vpop.permute.xlu0 %452
        %v455 = vsel %vm434, %v453, 0.0
        %456 = vadd.xlane.f32.xlu0 %v455
        %v457 = vpop.xlane.xlu0 %456
        %v458 = vmul.f32 %v457, %v438
        %v459 = vadd.f32 %v458, 1e-06
        %v460 = vrsqrt.pop %v459
        %v461 = vmul.f32 %v428, %v460
        %v463 = vlaneseq
        %v464 = vshrl.u32 %v463, 7
        %v465 = vsub.s32 0, %v464
        %v466 = vrot.slane %v450, %v465
        %467 = vrot.lane.b32.xlu0 %v466, 64
        %v468 = vpop.permute.xlu0 %467
        %v470 = vmul.f32 %v461, %v468
        %v471 = vld [vmem:[#allocation8] sm:$0xff]
        %v472 = vld [vmem:[%s5] sm:$0xff]
        %v473 = vld [vmem:[#allocation10] sm:$0xff]
        %v474 = vld [vmem:[#allocation10 + $0x8] sm:$0xff]
        %v475 = vld [vmem:[#allocation10 + $0x10] sm:$0xff]
        %v476 = vld [vmem:[#allocation10 + $0x18] sm:$0xff]
        %v477 = vld [vmem:[#allocation10 + $0x20] sm:$0xff]
        %v478 = vld [vmem:[#allocation10 + $0x28] sm:$0xff]
        %v479 = vld [vmem:[#allocation10 + $0x30] sm:$0xff]
        %v480 = vld [vmem:[#allocation10 + $0x38] sm:$0xff]
        %482 = vrot.lane.b32.xlu0 %v449, 120
        %v483 = vpop.permute.xlu0 %482
        %485 = vrot.lane.b32.xlu0 %v449, 8
        %v486 = vpop.permute.xlu0 %485
        %vm488 = vcmask 64512
        %v489 = vsel %vm488, %v483, %v486
        %v490 = vmul.f32 %v449, %v471
        %v491 = vmul.f32 %v489, %v472
        %v492 = vadd.f32 %v490, %v491
        %494 = vrot.lane.b32.xlu0 %v470, 56
        %v495 = vpop.permute.xlu0 %494
        %497 = vrot.lane.b32.xlu0 %v470, 72
        %v498 = vpop.permute.xlu0 %497
        %v500 = vsel %vm488, %v495, %v498
        %502 = vrot.lane.b32.xlu0 %v471, 64
        %v503 = vpop.permute.xlu0 %502
        %v505 = vmul.f32 %v470, %v503
        %v506 = vmul.f32 %v500, %v472
        %508 = vrot.lane.b32.xlu0 %v506, 64
        %v509 = vpop.permute.xlu0 %508
        %v511 = vadd.f32 %v505, %v509
        %513 = vrot.lane.b32.xlu0 %v511, 64
        %v514 = vpop.permute.xlu0 %513
        %vm515 = vcmask 130048
        %v517 = vsel %vm515, %v492, 0
        %v519 = vsel %vm515, %v514, 0
        %521 = vmatprep.subr.mxu0 0.0
        %522 = vmatpush1.xpose.msra.mxu0 0.0
        %523 = vmatprep.subr.mxu0 0.0
        %524 = vmatpush1.xpose.msra.mxu0 0.0
        %525 = vmatprep.subr.mxu0 0.0
        %526 = vmatpush1.xpose.msra.mxu0 0.0
        %527 = vmatprep.subr.mxu0 0.0
        %528 = vmatpush1.xpose.msra.mxu0 0.0
        %529 = vmatprep.subr.mxu0 0.0
        %530 = vmatpush1.xpose.msra.mxu0 0.0
        %531 = vmatprep.subr.mxu0 0.0
        %532 = vmatpush1.xpose.msra.mxu0 0.0
        %533 = vmatprep.subr.mxu0 0.0
        %534 = vmatpush1.xpose.msra.mxu0 0.0
        %535 = vmatprep.subr.mxu0 0.0
        %536 = vmatpush1.xpose.msra.mxu0 0.0
        %537 = vmatprep.subr.mxu0 0.0
        %538 = vmatpush1.xpose.msra.mxu0 0.0
        %539 = vmatprep.subr.mxu0 0.0
        %540 = vmatpush1.xpose.msra.mxu0 0.0
        %541 = vmatprep.subr.mxu0 0.0
        %542 = vmatpush1.xpose.msra.mxu0 0.0
        %543 = vmatprep.subr.mxu0 0.0
        %544 = vmatpush1.xpose.msra.mxu0 0.0
        %545 = vmatprep.subr.mxu0 0.0
        %546 = vmatpush1.xpose.msra.mxu0 0.0
        %547 = vmatprep.subr.mxu0 0.0
        %548 = vmatpush1.xpose.msra.mxu0 0.0
        %549 = vmatprep.subr.mxu0 0.0
        %550 = vmatpush1.xpose.msra.mxu0 0.0
        %551 = vmatprep.subr.mxu0 0.0
        %552 = vmatpush1.xpose.msra.mxu0 %v519
        %553 = vmatprep.subr.mxu0 0.0
        %554 = vmatpush2.xpose.msra.mxu0 0.0
        %555 = vmatprep.subr.mxu0 0.0
        %556 = vmatpush2.xpose.msra.mxu0 0.0
        %557 = vmatprep.subr.mxu0 0.0
        %558 = vmatpush2.xpose.msra.mxu0 0.0
        %559 = vmatprep.subr.mxu0 0.0
        %560 = vmatpush2.xpose.msra.mxu0 0.0
        %561 = vmatprep.subr.mxu0 0.0
        %562 = vmatpush2.xpose.msra.mxu0 0.0
        %563 = vmatprep.subr.mxu0 0.0
        %564 = vmatpush2.xpose.msra.mxu0 0.0
        %565 = vmatprep.subr.mxu0 0.0
        %566 = vmatpush2.xpose.msra.mxu0 0.0
        %567 = vmatprep.subr.mxu0 0.0
        %568 = vmatpush2.xpose.msra.mxu0 0.0
        %569 = vmatprep.subr.mxu0 0.0
        %570 = vmatpush2.xpose.msra.mxu0 0.0
        %571 = vmatprep.subr.mxu0 0.0
        %572 = vmatpush2.xpose.msra.mxu0 0.0
        %573 = vmatprep.subr.mxu0 0.0
        %574 = vmatpush2.xpose.msra.mxu0 0.0
        %575 = vmatprep.subr.mxu0 0.0
        %576 = vmatpush2.xpose.msra.mxu0 0.0
        %577 = vmatprep.subr.mxu0 0.0
        %578 = vmatpush2.xpose.msra.mxu0 0.0
        %579 = vmatprep.subr.mxu0 0.0
        %580 = vmatpush2.xpose.msra.mxu0 0.0
        %581 = vmatprep.subr.mxu0 0.0
        %582 = vmatpush2.xpose.msra.mxu0 0.0
        %583 = vmatprep.subr.mxu0 0.0
        %584 = vmatpush2.xpose.msra.mxu0 0.0
        %585 = vmatprep.mubr.f32.mxu0 0.0
        %586 = vmatmul.mubr.f32.gmra.mxu0 %v517
        %v587 = vpop.f32.mrf.mxu0
        %v588 = vadd.f32 0.0, %v587
        %v589 = vpop.f32.mrf.mxu0
        %590 = vdwg.mxu0
        %v591 = vsel %vm488, %v588, -inf
        %592 = vmax.xlane.f32.xlu0 %v591
        %v593 = vpop.xlane.xlu0 %592
        %v594 = vsub.f32 %v588, %v593
        %v595 = vmul.f32 %v594, 1.442695
        %v596 = vpow.pop %v595
        %v597 = vsel %vm488, %v596, 0.0
        %598 = vadd.xlane.f32.xlu0 %v597
        %v599 = vpop.xlane.xlu0 %598
        %v601 = vsel %vm488, %v596, 0
        %603 = vmatprep.subr.mxu0 0.0
        %604 = vmatpush1.msra.mxu0 0.0
        %605 = vmatprep.subr.mxu0 0.0
        %606 = vmatpush1.msra.mxu0 0.0
        %607 = vmatprep.subr.mxu0 0.0
        %608 = vmatpush1.msra.mxu0 0.0
        %609 = vmatprep.subr.mxu0 0.0
        %610 = vmatpush1.msra.mxu0 0.0
        %611 = vmatprep.subr.mxu0 0.0
        %612 = vmatpush1.msra.mxu0 0.0
        %613 = vmatprep.subr.mxu0 0.0
        %614 = vmatpush1.msra.mxu0 0.0
        %615 = vmatprep.subr.mxu0 0.0
        %616 = vmatpush1.msra.mxu0 0.0
        %617 = vmatprep.subr.mxu0 0.0
        %618 = vmatpush1.msra.mxu0 0.0
        %619 = vmatprep.subr.mxu0 0.0
        %620 = vmatpush1.msra.mxu0 0.0
        %621 = vmatprep.subr.mxu0 0.0
        %622 = vmatpush1.msra.mxu0 0.0
        %623 = vmatprep.subr.mxu0 0.0
        %624 = vmatpush1.msra.mxu0 0.0
        %625 = vmatprep.subr.mxu0 0.0
        %626 = vmatpush1.msra.mxu0 0.0
        %627 = vmatprep.subr.mxu0 0.0
        %628 = vmatpush1.msra.mxu0 0.0
        %629 = vmatprep.subr.mxu0 0.0
        %630 = vmatpush1.msra.mxu0 0.0
        %631 = vmatprep.subr.mxu0 0.0
        %632 = vmatpush1.msra.mxu0 0.0
        %633 = vmatprep.subr.mxu0 0.0
        %634 = vmatpush1.msra.mxu0 %v430
        %635 = vmatprep.subr.mxu0 0.0
        %636 = vmatpush2.msra.mxu0 0.0
        %637 = vmatprep.subr.mxu0 0.0
        %638 = vmatpush2.msra.mxu0 0.0
        %639 = vmatprep.subr.mxu0 0.0
        %640 = vmatpush2.msra.mxu0 0.0
        %641 = vmatprep.subr.mxu0 0.0
        %642 = vmatpush2.msra.mxu0 0.0
        %643 = vmatprep.subr.mxu0 0.0
        %644 = vmatpush2.msra.mxu0 0.0
        %645 = vmatprep.subr.mxu0 0.0
        %646 = vmatpush2.msra.mxu0 0.0
        %647 = vmatprep.subr.mxu0 0.0
        %648 = vmatpush2.msra.mxu0 0.0
        %649 = vmatprep.subr.mxu0 0.0
        %650 = vmatpush2.msra.mxu0 0.0
        %651 = vmatprep.subr.mxu0 0.0
        %652 = vmatpush2.msra.mxu0 0.0
        %653 = vmatprep.subr.mxu0 0.0
        %654 = vmatpush2.msra.mxu0 0.0
        %655 = vmatprep.subr.mxu0 0.0
        %656 = vmatpush2.msra.mxu0 0.0
        %657 = vmatprep.subr.mxu0 0.0
        %658 = vmatpush2.msra.mxu0 0.0
        %659 = vmatprep.subr.mxu0 0.0
        %660 = vmatpush2.msra.mxu0 0.0
        %661 = vmatprep.subr.mxu0 0.0
        %662 = vmatpush2.msra.mxu0 0.0
        %663 = vmatprep.subr.mxu0 0.0
        %664 = vmatpush2.msra.mxu0 0.0
        %665 = vmatprep.subr.mxu0 0.0
        %666 = vmatpush2.msra.mxu0 0.0
        %667 = vmatprep.mubr.f32.mxu0 0.0
        %668 = vmatmul.mubr.f32.gmra.mxu0 %v601
        %v669 = vpop.f32.mrf.mxu0
        %v670 = vadd.f32 0.0, %v669
        %v671 = vpop.f32.mrf.mxu0
        %672 = vdwg.mxu0
        %v673 = vrcp.pop %v599
        %v674 = vmul.f32 %v670, %v673
        %675 = vrot.lane.b32.xlu0 %v449, 104
        %v676 = vpop.permute.xlu0 %675
        %v678 = vsel %vm488, %v676, %v483
        %679 = vrot.lane.b32.xlu0 %v471, 16
        %v680 = vpop.permute.xlu0 %679
        %v682 = vmul.f32 %v449, %v680
        %v683 = vmul.f32 %v678, %v472
        %685 = vrot.lane.b32.xlu0 %v683, 16
        %v686 = vpop.permute.xlu0 %685
        %v688 = vadd.f32 %v682, %v686
        %689 = vrot.lane.b32.xlu0 %v470, 40
        %v690 = vpop.permute.xlu0 %689
        %v692 = vsel %vm488, %v690, %v495
        %693 = vrot.lane.b32.xlu0 %v471, 80
        %v694 = vpop.permute.xlu0 %693
        %v696 = vmul.f32 %v470, %v694
        %v697 = vmul.f32 %v692, %v472
        %699 = vrot.lane.b32.xlu0 %v697, 80
        %v700 = vpop.permute.xlu0 %699
        %v702 = vadd.f32 %v696, %v700
        %704 = vrot.lane.b32.xlu0 %v688, 112
        %v705 = vpop.permute.xlu0 %704
        %707 = vrot.lane.b32.xlu0 %v702, 48
        %v708 = vpop.permute.xlu0 %707
        %v709 = vsel %vm515, %v705, 0
        %v711 = vsel %vm515, %v708, 0
        %713 = vmatprep.subr.mxu0 0.0
        %714 = vmatpush1.xpose.msra.mxu0 0.0
        %715 = vmatprep.subr.mxu0 0.0
        %716 = vmatpush1.xpose.msra.mxu0 0.0
        %717 = vmatprep.subr.mxu0 0.0
        %718 = vmatpush1.xpose.msra.mxu0 0.0
        %719 = vmatprep.subr.mxu0 0.0
        %720 = vmatpush1.xpose.msra.mxu0 0.0
        %721 = vmatprep.subr.mxu0 0.0
        %722 = vmatpush1.xpose.msra.mxu0 0.0
        %723 = vmatprep.subr.mxu0 0.0
        %724 = vmatpush1.xpose.msra.mxu0 0.0
        %725 = vmatprep.subr.mxu0 0.0
        %726 = vmatpush1.xpose.msra.mxu0 0.0
        %727 = vmatprep.subr.mxu0 0.0
        %728 = vmatpush1.xpose.msra.mxu0 0.0
        %729 = vmatprep.subr.mxu0 0.0
        %730 = vmatpush1.xpose.msra.mxu0 0.0
        %731 = vmatprep.subr.mxu0 0.0
        %732 = vmatpush1.xpose.msra.mxu0 0.0
        %733 = vmatprep.subr.mxu0 0.0
        %734 = vmatpush1.xpose.msra.mxu0 0.0
        %735 = vmatprep.subr.mxu0 0.0
        %736 = vmatpush1.xpose.msra.mxu0 0.0
        %737 = vmatprep.subr.mxu0 0.0
        %738 = vmatpush1.xpose.msra.mxu0 0.0
        %739 = vmatprep.subr.mxu0 0.0
        %740 = vmatpush1.xpose.msra.mxu0 0.0
        %741 = vmatprep.subr.mxu0 0.0
        %742 = vmatpush1.xpose.msra.mxu0 0.0
        %743 = vmatprep.subr.mxu0 0.0
        %744 = vmatpush1.xpose.msra.mxu0 %v711
        %745 = vmatprep.subr.mxu0 0.0
        %746 = vmatpush2.xpose.msra.mxu0 0.0
        %747 = vmatprep.subr.mxu0 0.0
        %748 = vmatpush2.xpose.msra.mxu0 0.0
        %749 = vmatprep.subr.mxu0 0.0
        %750 = vmatpush2.xpose.msra.mxu0 0.0
        %751 = vmatprep.subr.mxu0 0.0
        %752 = vmatpush2.xpose.msra.mxu0 0.0
        %753 = vmatprep.subr.mxu0 0.0
        %754 = vmatpush2.xpose.msra.mxu0 0.0
        %755 = vmatprep.subr.mxu0 0.0
        %756 = vmatpush2.xpose.msra.mxu0 0.0
        %757 = vmatprep.subr.mxu0 0.0
        %758 = vmatpush2.xpose.msra.mxu0 0.0
        %759 = vmatprep.subr.mxu0 0.0
        %760 = vmatpush2.xpose.msra.mxu0 0.0
        %761 = vmatprep.subr.mxu0 0.0
        %762 = vmatpush2.xpose.msra.mxu0 0.0
        %763 = vmatprep.subr.mxu0 0.0
        %764 = vmatpush2.xpose.msra.mxu0 0.0
        %765 = vmatprep.subr.mxu0 0.0
        %766 = vmatpush2.xpose.msra.mxu0 0.0
        %767 = vmatprep.subr.mxu0 0.0
        %768 = vmatpush2.xpose.msra.mxu0 0.0
        %769 = vmatprep.subr.mxu0 0.0
        %770 = vmatpush2.xpose.msra.mxu0 0.0
        %771 = vmatprep.subr.mxu0 0.0
        %772 = vmatpush2.xpose.msra.mxu0 0.0
        %773 = vmatprep.subr.mxu0 0.0
        %774 = vmatpush2.xpose.msra.mxu0 0.0
        %775 = vmatprep.subr.mxu0 0.0
        %776 = vmatpush2.xpose.msra.mxu0 0.0
        %777 = vmatprep.mubr.f32.mxu0 0.0
        %778 = vmatmul.mubr.f32.gmra.mxu0 %v709
        %v779 = vpop.f32.mrf.mxu0
        %v780 = vadd.f32 0.0, %v779
        %v781 = vpop.f32.mrf.mxu0
        %782 = vdwg.mxu0
        %v783 = vsel %vm488, %v780, -inf
        %784 = vmax.xlane.f32.xlu0 %v783
        %v785 = vpop.xlane.xlu0 %784
        %v786 = vsub.f32 %v780, %v785
        %v787 = vmul.f32 %v786, 1.442695
        %v788 = vpow.pop %v787
        %v789 = vsel %vm488, %v788, 0.0
        %790 = vadd.xlane.f32.xlu0 %v789
        %v791 = vpop.xlane.xlu0 %790
        %793 = vrot.lane.b32.xlu0 %v430, 112
        %v794 = vpop.permute.xlu0 %793
        %v797 = vsel %vm488, %v788, 0
        %799 = vmatprep.subr.mxu0 0.0
        %800 = vmatpush1.msra.mxu0 0.0
        %801 = vmatprep.subr.mxu0 0.0
        %802 = vmatpush1.msra.mxu0 0.0
        %803 = vmatprep.subr.mxu0 0.0
        %804 = vmatpush1.msra.mxu0 0.0
        %805 = vmatprep.subr.mxu0 0.0
        %806 = vmatpush1.msra.mxu0 0.0
        %807 = vmatprep.subr.mxu0 0.0
        %808 = vmatpush1.msra.mxu0 0.0
        %809 = vmatprep.subr.mxu0 0.0
        %810 = vmatpush1.msra.mxu0 0.0
        %811 = vmatprep.subr.mxu0 0.0
        %812 = vmatpush1.msra.mxu0 0.0
        %813 = vmatprep.subr.mxu0 0.0
        %814 = vmatpush1.msra.mxu0 0.0
        %815 = vmatprep.subr.mxu0 0.0
        %816 = vmatpush1.msra.mxu0 0.0
        %817 = vmatprep.subr.mxu0 0.0
        %818 = vmatpush1.msra.mxu0 0.0
        %819 = vmatprep.subr.mxu0 0.0
        %820 = vmatpush1.msra.mxu0 0.0
        %821 = vmatprep.subr.mxu0 0.0
        %822 = vmatpush1.msra.mxu0 0.0
        %823 = vmatprep.subr.mxu0 0.0
        %824 = vmatpush1.msra.mxu0 0.0
        %825 = vmatprep.subr.mxu0 0.0
        %826 = vmatpush1.msra.mxu0 0.0
        %827 = vmatprep.subr.mxu0 0.0
        %828 = vmatpush1.msra.mxu0 0.0
        %829 = vmatprep.subr.mxu0 0.0
        %830 = vmatpush1.msra.mxu0 %v794
        %831 = vmatprep.subr.mxu0 0.0
        %832 = vmatpush2.msra.mxu0 0.0
        %833 = vmatprep.subr.mxu0 0.0
        %834 = vmatpush2.msra.mxu0 0.0
        %835 = vmatprep.subr.mxu0 0.0
        %836 = vmatpush2.msra.mxu0 0.0
        %837 = vmatprep.subr.mxu0 0.0
        %838 = vmatpush2.msra.mxu0 0.0
        %839 = vmatprep.subr.mxu0 0.0
        %840 = vmatpush2.msra.mxu0 0.0
        %841 = vmatprep.subr.mxu0 0.0
        %842 = vmatpush2.msra.mxu0 0.0
        %843 = vmatprep.subr.mxu0 0.0
        %844 = vmatpush2.msra.mxu0 0.0
        %845 = vmatprep.subr.mxu0 0.0
        %846 = vmatpush2.msra.mxu0 0.0
        %847 = vmatprep.subr.mxu0 0.0
        %848 = vmatpush2.msra.mxu0 0.0
        %849 = vmatprep.subr.mxu0 0.0
        %850 = vmatpush2.msra.mxu0 0.0
        %851 = vmatprep.subr.mxu0 0.0
        %852 = vmatpush2.msra.mxu0 0.0
        %853 = vmatprep.subr.mxu0 0.0
        %854 = vmatpush2.msra.mxu0 0.0
        %855 = vmatprep.subr.mxu0 0.0
        %856 = vmatpush2.msra.mxu0 0.0
        %857 = vmatprep.subr.mxu0 0.0
        %858 = vmatpush2.msra.mxu0 0.0
        %859 = vmatprep.subr.mxu0 0.0
        %860 = vmatpush2.msra.mxu0 0.0
        %861 = vmatprep.subr.mxu0 0.0
        %862 = vmatpush2.msra.mxu0 0.0
        %863 = vmatprep.mubr.f32.mxu0 0.0
        %864 = vmatmul.mubr.f32.gmra.mxu0 %v797
        %v865 = vpop.f32.mrf.mxu0
        %v866 = vadd.f32 0.0, %v865
        %v867 = vpop.f32.mrf.mxu0
        %868 = vdwg.mxu0
        %v869 = vrcp.pop %v791
        %v870 = vmul.f32 %v866, %v869
        %v872 = vsel %vm515, %v870, 0
        %874 = vmatprep.subr.mxu0 0.0
        %875 = vmatpush1.msra.mxu0 0.0
        %876 = vmatprep.subr.mxu0 0.0
        %877 = vmatpush1.msra.mxu0 0.0
        %878 = vmatprep.subr.mxu0 0.0
        %879 = vmatpush1.msra.mxu0 0.0
        %880 = vmatprep.subr.mxu0 0.0
        %881 = vmatpush1.msra.mxu0 0.0
        %882 = vmatprep.subr.mxu0 0.0
        %883 = vmatpush1.msra.mxu0 0.0
        %884 = vmatprep.subr.mxu0 0.0
        %885 = vmatpush1.msra.mxu0 0.0
        %886 = vmatprep.subr.mxu0 0.0
        %887 = vmatpush1.msra.mxu0 0.0
        %888 = vmatprep.subr.mxu0 0.0
        %889 = vmatpush1.msra.mxu0 0.0
        %890 = vmatprep.subr.mxu0 0.0
        %891 = vmatpush1.msra.mxu0 0.0
        %892 = vmatprep.subr.mxu0 0.0
        %893 = vmatpush1.msra.mxu0 0.0
        %894 = vmatprep.subr.mxu0 0.0
        %895 = vmatpush1.msra.mxu0 0.0
        %896 = vmatprep.subr.mxu0 0.0
        %897 = vmatpush1.msra.mxu0 0.0
        %898 = vmatprep.subr.mxu0 0.0
        %899 = vmatpush1.msra.mxu0 0.0
        %900 = vmatprep.subr.mxu0 0.0
        %901 = vmatpush1.msra.mxu0 0.0
        %902 = vmatprep.subr.mxu0 0.0
        %903 = vmatpush1.msra.mxu0 %v476
        %904 = vmatprep.subr.mxu0 0.0
        %905 = vmatpush1.msra.mxu0 %v475
        %906 = vmatprep.subr.mxu0 0.0
        %907 = vmatpush2.msra.mxu0 0.0
        %908 = vmatprep.subr.mxu0 0.0
        %909 = vmatpush2.msra.mxu0 0.0
        %910 = vmatprep.subr.mxu0 0.0
        %911 = vmatpush2.msra.mxu0 0.0
        %912 = vmatprep.subr.mxu0 0.0
        %913 = vmatpush2.msra.mxu0 0.0
        %914 = vmatprep.subr.mxu0 0.0
        %915 = vmatpush2.msra.mxu0 0.0
        %916 = vmatprep.subr.mxu0 0.0
        %917 = vmatpush2.msra.mxu0 0.0
        %918 = vmatprep.subr.mxu0 0.0
        %919 = vmatpush2.msra.mxu0 0.0
        %920 = vmatprep.subr.mxu0 0.0
        %921 = vmatpush2.msra.mxu0 0.0
        %922 = vmatprep.subr.mxu0 0.0
        %923 = vmatpush2.msra.mxu0 0.0
        %924 = vmatprep.subr.mxu0 0.0
        %925 = vmatpush2.msra.mxu0 0.0
        %926 = vmatprep.subr.mxu0 0.0
        %927 = vmatpush2.msra.mxu0 0.0
        %928 = vmatprep.subr.mxu0 0.0
        %929 = vmatpush2.msra.mxu0 0.0
        %930 = vmatprep.subr.mxu0 0.0
        %931 = vmatpush2.msra.mxu0 0.0
        %932 = vmatprep.subr.mxu0 0.0
        %933 = vmatpush2.msra.mxu0 0.0
        %934 = vmatprep.subr.mxu0 0.0
        %935 = vmatpush2.msra.mxu0 0.0
        %936 = vmatprep.subr.mxu0 0.0
        %937 = vmatpush2.msra.mxu0 0.0
        %938 = vmatprep.mubr.f32.mxu0 0.0
        %939 = vmatmul.mubr.f32.gmra.mxu0 %v872
        %v940 = vpop.f32.mrf.mxu0
        %v941 = vadd.f32 0.0, %v940
        %v942 = vpop.f32.mrf.mxu0
        %943 = vdwg.mxu0
        %v945 = vsel %vm515, %v674, 0
        %947 = vmatprep.subr.mxu0 0.0
        %948 = vmatpush1.msra.mxu0 0.0
        %949 = vmatprep.subr.mxu0 0.0
        %950 = vmatpush1.msra.mxu0 0.0
        %951 = vmatprep.subr.mxu0 0.0
        %952 = vmatpush1.msra.mxu0 0.0
        %953 = vmatprep.subr.mxu0 0.0
        %954 = vmatpush1.msra.mxu0 0.0
        %955 = vmatprep.subr.mxu0 0.0
        %956 = vmatpush1.msra.mxu0 0.0
        %957 = vmatprep.subr.mxu0 0.0
        %958 = vmatpush1.msra.mxu0 0.0
        %959 = vmatprep.subr.mxu0 0.0
        %960 = vmatpush1.msra.mxu0 0.0
        %961 = vmatprep.subr.mxu0 0.0
        %962 = vmatpush1.msra.mxu0 0.0
        %963 = vmatprep.subr.mxu0 0.0
        %964 = vmatpush1.msra.mxu0 0.0
        %965 = vmatprep.subr.mxu0 0.0
        %966 = vmatpush1.msra.mxu0 0.0
        %967 = vmatprep.subr.mxu0 0.0
        %968 = vmatpush1.msra.mxu0 0.0
        %969 = vmatprep.subr.mxu0 0.0
        %970 = vmatpush1.msra.mxu0 0.0
        %971 = vmatprep.subr.mxu0 0.0
        %972 = vmatpush1.msra.mxu0 0.0
        %973 = vmatprep.subr.mxu0 0.0
        %974 = vmatpush1.msra.mxu0 0.0
        %975 = vmatprep.subr.mxu0 0.0
        %976 = vmatpush1.msra.mxu0 %v474
        %977 = vmatprep.subr.mxu0 0.0
        %978 = vmatpush1.msra.mxu0 %v473
        %979 = vmatprep.subr.mxu0 0.0
        %980 = vmatpush2.msra.mxu0 0.0
        %981 = vmatprep.subr.mxu0 0.0
        %982 = vmatpush2.msra.mxu0 0.0
        %983 = vmatprep.subr.mxu0 0.0
        %984 = vmatpush2.msra.mxu0 0.0
        %985 = vmatprep.subr.mxu0 0.0
        %986 = vmatpush2.msra.mxu0 0.0
        %987 = vmatprep.subr.mxu0 0.0
        %988 = vmatpush2.msra.mxu0 0.0
        %989 = vmatprep.subr.mxu0 0.0
        %990 = vmatpush2.msra.mxu0 0.0
        %991 = vmatprep.subr.mxu0 0.0
        %992 = vmatpush2.msra.mxu0 0.0
        %993 = vmatprep.subr.mxu0 0.0
        %994 = vmatpush2.msra.mxu0 0.0
        %995 = vmatprep.subr.mxu0 0.0
        %996 = vmatpush2.msra.mxu0 0.0
        %997 = vmatprep.subr.mxu0 0.0
        %998 = vmatpush2.msra.mxu0 0.0
        %999 = vmatprep.subr.mxu0 0.0
        %1000 = vmatpush2.msra.mxu0 0.0
        %1001 = vmatprep.subr.mxu0 0.0
        %1002 = vmatpush2.msra.mxu0 0.0
        %1003 = vmatprep.subr.mxu0 0.0
        %1004 = vmatpush2.msra.mxu0 0.0
        %1005 = vmatprep.subr.mxu0 0.0
        %1006 = vmatpush2.msra.mxu0 0.0
        %1007 = vmatprep.subr.mxu0 0.0
        %1008 = vmatpush2.msra.mxu0 0.0
        %1009 = vmatprep.subr.mxu0 0.0
        %1010 = vmatpush2.msra.mxu0 0.0
        %1011 = vmatprep.mubr.f32.mxu0 0.0
        %1012 = vmatmul.mubr.f32.gmra.mxu0 %v945
        %v1013 = vpop.f32.mrf.mxu0
        %v1014 = vadd.f32 %v941, %v1013
        %v1015 = vpop.f32.mrf.mxu0
        %1016 = vdwg.mxu0
        %1017 = vrot.lane.b32.xlu0 %v449, 88
        %v1018 = vpop.permute.xlu0 %1017
        %v1020 = vsel %vm488, %v1018, %v676
        %1021 = vrot.lane.b32.xlu0 %v471, 32
        %v1022 = vpop.permute.xlu0 %1021
        %v1024 = vmul.f32 %v449, %v1022
        %v1025 = vmul.f32 %v1020, %v472
        %1027 = vrot.lane.b32.xlu0 %v1025, 32
        %v1028 = vpop.permute.xlu0 %1027
        %v1030 = vadd.f32 %v1024, %v1028
        %1031 = vrot.lane.b32.xlu0 %v470, 24
        %v1032 = vpop.permute.xlu0 %1031
        %v1034 = vsel %vm488, %v1032, %v690
        %1035 = vrot.lane.b32.xlu0 %v471, 96
        %v1036 = vpop.permute.xlu0 %1035
        %v1038 = vmul.f32 %v470, %v1036
        %v1039 = vmul.f32 %v1034, %v472
        %1041 = vrot.lane.b32.xlu0 %v1039, 96
        %v1042 = vpop.permute.xlu0 %1041
        %v1044 = vadd.f32 %v1038, %v1042
        %1046 = vrot.lane.b32.xlu0 %v1030, 96
        %v1047 = vpop.permute.xlu0 %1046
        %1049 = vrot.lane.b32.xlu0 %v1044, 32
        %v1050 = vpop.permute.xlu0 %1049
        %v1051 = vsel %vm515, %v1047, 0
        %v1053 = vsel %vm515, %v1050, 0
        %1055 = vmatprep.subr.mxu0 0.0
        %1056 = vmatpush1.xpose.msra.mxu0 0.0
        %1057 = vmatprep.subr.mxu0 0.0
        %1058 = vmatpush1.xpose.msra.mxu0 0.0
        %1059 = vmatprep.subr.mxu0 0.0
        %1060 = vmatpush1.xpose.msra.mxu0 0.0
        %1061 = vmatprep.subr.mxu0 0.0
        %1062 = vmatpush1.xpose.msra.mxu0 0.0
        %1063 = vmatprep.subr.mxu0 0.0
        %1064 = vmatpush1.xpose.msra.mxu0 0.0
        %1065 = vmatprep.subr.mxu0 0.0
        %1066 = vmatpush1.xpose.msra.mxu0 0.0
        %1067 = vmatprep.subr.mxu0 0.0
        %1068 = vmatpush1.xpose.msra.mxu0 0.0
        %1069 = vmatprep.subr.mxu0 0.0
        %1070 = vmatpush1.xpose.msra.mxu0 0.0
        %1071 = vmatprep.subr.mxu0 0.0
        %1072 = vmatpush1.xpose.msra.mxu0 0.0
        %1073 = vmatprep.subr.mxu0 0.0
        %1074 = vmatpush1.xpose.msra.mxu0 0.0
        %1075 = vmatprep.subr.mxu0 0.0
        %1076 = vmatpush1.xpose.msra.mxu0 0.0
        %1077 = vmatprep.subr.mxu0 0.0
        %1078 = vmatpush1.xpose.msra.mxu0 0.0
        %1079 = vmatprep.subr.mxu0 0.0
        %1080 = vmatpush1.xpose.msra.mxu0 0.0
        %1081 = vmatprep.subr.mxu0 0.0
        %1082 = vmatpush1.xpose.msra.mxu0 0.0
        %1083 = vmatprep.subr.mxu0 0.0
        %1084 = vmatpush1.xpose.msra.mxu0 0.0
        %1085 = vmatprep.subr.mxu0 0.0
        %1086 = vmatpush1.xpose.msra.mxu0 %v1053
        %1087 = vmatprep.subr.mxu0 0.0
        %1088 = vmatpush2.xpose.msra.mxu0 0.0
        %1089 = vmatprep.subr.mxu0 0.0
        %1090 = vmatpush2.xpose.msra.mxu0 0.0
        %1091 = vmatprep.subr.mxu0 0.0
        %1092 = vmatpush2.xpose.msra.mxu0 0.0
        %1093 = vmatprep.subr.mxu0 0.0
        %1094 = vmatpush2.xpose.msra.mxu0 0.0
        %1095 = vmatprep.subr.mxu0 0.0
        %1096 = vmatpush2.xpose.msra.mxu0 0.0
        %1097 = vmatprep.subr.mxu0 0.0
        %1098 = vmatpush2.xpose.msra.mxu0 0.0
        %1099 = vmatprep.subr.mxu0 0.0
        %1100 = vmatpush2.xpose.msra.mxu0 0.0
        %1101 = vmatprep.subr.mxu0 0.0
        %1102 = vmatpush2.xpose.msra.mxu0 0.0
        %1103 = vmatprep.subr.mxu0 0.0
        %1104 = vmatpush2.xpose.msra.mxu0 0.0
        %1105 = vmatprep.subr.mxu0 0.0
        %1106 = vmatpush2.xpose.msra.mxu0 0.0
        %1107 = vmatprep.subr.mxu0 0.0
        %1108 = vmatpush2.xpose.msra.mxu0 0.0
        %1109 = vmatprep.subr.mxu0 0.0
        %1110 = vmatpush2.xpose.msra.mxu0 0.0
        %1111 = vmatprep.subr.mxu0 0.0
        %1112 = vmatpush2.xpose.msra.mxu0 0.0
        %1113 = vmatprep.subr.mxu0 0.0
        %1114 = vmatpush2.xpose.msra.mxu0 0.0
        %1115 = vmatprep.subr.mxu0 0.0
        %1116 = vmatpush2.xpose.msra.mxu0 0.0
        %1117 = vmatprep.subr.mxu0 0.0
        %1118 = vmatpush2.xpose.msra.mxu0 0.0
        %1119 = vmatprep.mubr.f32.mxu0 0.0
        %1120 = vmatmul.mubr.f32.gmra.mxu0 %v1051
        %v1121 = vpop.f32.mrf.mxu0
        %v1122 = vadd.f32 0.0, %v1121
        %v1123 = vpop.f32.mrf.mxu0
        %1124 = vdwg.mxu0
        %v1125 = vsel %vm488, %v1122, -inf
        %1126 = vmax.xlane.f32.xlu0 %v1125
        %v1127 = vpop.xlane.xlu0 %1126
        %v1128 = vsub.f32 %v1122, %v1127
        %v1129 = vmul.f32 %v1128, 1.442695
        %v1130 = vpow.pop %v1129
        %v1131 = vsel %vm488, %v1130, 0.0
        %1132 = vadd.xlane.f32.xlu0 %v1131
        %v1133 = vpop.xlane.xlu0 %1132
        %1134 = vrot.lane.b32.xlu0 %v430, 96
        %v1135 = vpop.permute.xlu0 %1134
        %v1138 = vsel %vm488, %v1130, 0
        %1140 = vmatprep.subr.mxu0 0.0
        %1141 = vmatpush1.msra.mxu0 0.0
        %1142 = vmatprep.subr.mxu0 0.0
        %1143 = vmatpush1.msra.mxu0 0.0
        %1144 = vmatprep.subr.mxu0 0.0
        %1145 = vmatpush1.msra.mxu0 0.0
        %1146 = vmatprep.subr.mxu0 0.0
        %1147 = vmatpush1.msra.mxu0 0.0
        %1148 = vmatprep.subr.mxu0 0.0
        %1149 = vmatpush1.msra.mxu0 0.0
        %1150 = vmatprep.subr.mxu0 0.0
        %1151 = vmatpush1.msra.mxu0 0.0
        %1152 = vmatprep.subr.mxu0 0.0
        %1153 = vmatpush1.msra.mxu0 0.0
        %1154 = vmatprep.subr.mxu0 0.0
        %1155 = vmatpush1.msra.mxu0 0.0
        %1156 = vmatprep.subr.mxu0 0.0
        %1157 = vmatpush1.msra.mxu0 0.0
        %1158 = vmatprep.subr.mxu0 0.0
        %1159 = vmatpush1.msra.mxu0 0.0
        %1160 = vmatprep.subr.mxu0 0.0
        %1161 = vmatpush1.msra.mxu0 0.0
        %1162 = vmatprep.subr.mxu0 0.0
        %1163 = vmatpush1.msra.mxu0 0.0
        %1164 = vmatprep.subr.mxu0 0.0
        %1165 = vmatpush1.msra.mxu0 0.0
        %1166 = vmatprep.subr.mxu0 0.0
        %1167 = vmatpush1.msra.mxu0 0.0
        %1168 = vmatprep.subr.mxu0 0.0
        %1169 = vmatpush1.msra.mxu0 0.0
        %1170 = vmatprep.subr.mxu0 0.0
        %1171 = vmatpush1.msra.mxu0 %v1135
        %1172 = vmatprep.subr.mxu0 0.0
        %1173 = vmatpush2.msra.mxu0 0.0
        %1174 = vmatprep.subr.mxu0 0.0
        %1175 = vmatpush2.msra.mxu0 0.0
        %1176 = vmatprep.subr.mxu0 0.0
        %1177 = vmatpush2.msra.mxu0 0.0
        %1178 = vmatprep.subr.mxu0 0.0
        %1179 = vmatpush2.msra.mxu0 0.0
        %1180 = vmatprep.subr.mxu0 0.0
        %1181 = vmatpush2.msra.mxu0 0.0
        %1182 = vmatprep.subr.mxu0 0.0
        %1183 = vmatpush2.msra.mxu0 0.0
        %1184 = vmatprep.subr.mxu0 0.0
        %1185 = vmatpush2.msra.mxu0 0.0
        %1186 = vmatprep.subr.mxu0 0.0
        %1187 = vmatpush2.msra.mxu0 0.0
        %1188 = vmatprep.subr.mxu0 0.0
        %1189 = vmatpush2.msra.mxu0 0.0
        %1190 = vmatprep.subr.mxu0 0.0
        %1191 = vmatpush2.msra.mxu0 0.0
        %1192 = vmatprep.subr.mxu0 0.0
        %1193 = vmatpush2.msra.mxu0 0.0
        %1194 = vmatprep.subr.mxu0 0.0
        %1195 = vmatpush2.msra.mxu0 0.0
        %1196 = vmatprep.subr.mxu0 0.0
        %1197 = vmatpush2.msra.mxu0 0.0
        %1198 = vmatprep.subr.mxu0 0.0
        %1199 = vmatpush2.msra.mxu0 0.0
        %1200 = vmatprep.subr.mxu0 0.0
        %1201 = vmatpush2.msra.mxu0 0.0
        %1202 = vmatprep.subr.mxu0 0.0
        %1203 = vmatpush2.msra.mxu0 0.0
        %1204 = vmatprep.mubr.f32.mxu0 0.0
        %1205 = vmatmul.mubr.f32.gmra.mxu0 %v1138
        %v1206 = vpop.f32.mrf.mxu0
        %v1207 = vadd.f32 0.0, %v1206
        %v1208 = vpop.f32.mrf.mxu0
        %1209 = vdwg.mxu0
        %v1210 = vrcp.pop %v1133
        %v1211 = vmul.f32 %v1207, %v1210
        %v1213 = vsel %vm515, %v1211, 0
        %1215 = vmatprep.subr.mxu0 0.0
        %1216 = vmatpush1.msra.mxu0 0.0
        %1217 = vmatprep.subr.mxu0 0.0
        %1218 = vmatpush1.msra.mxu0 0.0
        %1219 = vmatprep.subr.mxu0 0.0
        %1220 = vmatpush1.msra.mxu0 0.0
        %1221 = vmatprep.subr.mxu0 0.0
        %1222 = vmatpush1.msra.mxu0 0.0
        %1223 = vmatprep.subr.mxu0 0.0
        %1224 = vmatpush1.msra.mxu0 0.0
        %1225 = vmatprep.subr.mxu0 0.0
        %1226 = vmatpush1.msra.mxu0 0.0
        %1227 = vmatprep.subr.mxu0 0.0
        %1228 = vmatpush1.msra.mxu0 0.0
        %1229 = vmatprep.subr.mxu0 0.0
        %1230 = vmatpush1.msra.mxu0 0.0
        %1231 = vmatprep.subr.mxu0 0.0
        %1232 = vmatpush1.msra.mxu0 0.0
        %1233 = vmatprep.subr.mxu0 0.0
        %1234 = vmatpush1.msra.mxu0 0.0
        %1235 = vmatprep.subr.mxu0 0.0
        %1236 = vmatpush1.msra.mxu0 0.0
        %1237 = vmatprep.subr.mxu0 0.0
        %1238 = vmatpush1.msra.mxu0 0.0
        %1239 = vmatprep.subr.mxu0 0.0
        %1240 = vmatpush1.msra.mxu0 0.0
        %1241 = vmatprep.subr.mxu0 0.0
        %1242 = vmatpush1.msra.mxu0 0.0
        %1243 = vmatprep.subr.mxu0 0.0
        %1244 = vmatpush1.msra.mxu0 %v478
        %1245 = vmatprep.subr.mxu0 0.0
        %1246 = vmatpush1.msra.mxu0 %v477
        %1247 = vmatprep.subr.mxu0 0.0
        %1248 = vmatpush2.msra.mxu0 0.0
        %1249 = vmatprep.subr.mxu0 0.0
        %1250 = vmatpush2.msra.mxu0 0.0
        %1251 = vmatprep.subr.mxu0 0.0
        %1252 = vmatpush2.msra.mxu0 0.0
        %1253 = vmatprep.subr.mxu0 0.0
        %1254 = vmatpush2.msra.mxu0 0.0
        %1255 = vmatprep.subr.mxu0 0.0
        %1256 = vmatpush2.msra.mxu0 0.0
        %1257 = vmatprep.subr.mxu0 0.0
        %1258 = vmatpush2.msra.mxu0 0.0
        %1259 = vmatprep.subr.mxu0 0.0
        %1260 = vmatpush2.msra.mxu0 0.0
        %1261 = vmatprep.subr.mxu0 0.0
        %1262 = vmatpush2.msra.mxu0 0.0
        %1263 = vmatprep.subr.mxu0 0.0
        %1264 = vmatpush2.msra.mxu0 0.0
        %1265 = vmatprep.subr.mxu0 0.0
        %1266 = vmatpush2.msra.mxu0 0.0
        %1267 = vmatprep.subr.mxu0 0.0
        %1268 = vmatpush2.msra.mxu0 0.0
        %1269 = vmatprep.subr.mxu0 0.0
        %1270 = vmatpush2.msra.mxu0 0.0
        %1271 = vmatprep.subr.mxu0 0.0
        %1272 = vmatpush2.msra.mxu0 0.0
        %1273 = vmatprep.subr.mxu0 0.0
        %1274 = vmatpush2.msra.mxu0 0.0
        %1275 = vmatprep.subr.mxu0 0.0
        %1276 = vmatpush2.msra.mxu0 0.0
        %1277 = vmatprep.subr.mxu0 0.0
        %1278 = vmatpush2.msra.mxu0 0.0
        %1279 = vmatprep.mubr.f32.mxu0 0.0
        %1280 = vmatmul.mubr.f32.gmra.mxu0 %v1213
        %v1281 = vpop.f32.mrf.mxu0
        %v1282 = vadd.f32 0.0, %v1281
        %v1283 = vpop.f32.mrf.mxu0
        %1284 = vdwg.mxu0
        %v1285 = vadd.f32 %v1014, %v1282
        %1286 = vrot.lane.b32.xlu0 %v449, 72
        %v1287 = vpop.permute.xlu0 %1286
        %v1289 = vsel %vm488, %v1287, %v1018
        %1290 = vrot.lane.b32.xlu0 %v471, 48
        %v1291 = vpop.permute.xlu0 %1290
        %v1293 = vmul.f32 %v449, %v1291
        %v1294 = vmul.f32 %v1289, %v472
        %1296 = vrot.lane.b32.xlu0 %v1294, 48
        %v1297 = vpop.permute.xlu0 %1296
        %v1299 = vadd.f32 %v1293, %v1297
        %1300 = vrot.lane.b32.xlu0 %v470, 8
        %v1301 = vpop.permute.xlu0 %1300
        %v1303 = vsel %vm488, %v1301, %v1032
        %1304 = vrot.lane.b32.xlu0 %v471, 112
        %v1305 = vpop.permute.xlu0 %1304
        %v1307 = vmul.f32 %v470, %v1305
        %v1308 = vmul.f32 %v1303, %v472
        %1310 = vrot.lane.b32.xlu0 %v1308, 112
        %v1311 = vpop.permute.xlu0 %1310
        %v1313 = vadd.f32 %v1307, %v1311
        %1315 = vrot.lane.b32.xlu0 %v1299, 80
        %v1316 = vpop.permute.xlu0 %1315
        %1318 = vrot.lane.b32.xlu0 %v1313, 16
        %v1319 = vpop.permute.xlu0 %1318
        %v1320 = vsel %vm515, %v1316, 0
        %v1322 = vsel %vm515, %v1319, 0
        %1324 = vmatprep.subr.mxu0 0.0
        %1325 = vmatpush1.xpose.msra.mxu0 0.0
        %1326 = vmatprep.subr.mxu0 0.0
        %1327 = vmatpush1.xpose.msra.mxu0 0.0
        %1328 = vmatprep.subr.mxu0 0.0
        %1329 = vmatpush1.xpose.msra.mxu0 0.0
        %1330 = vmatprep.subr.mxu0 0.0
        %1331 = vmatpush1.xpose.msra.mxu0 0.0
        %1332 = vmatprep.subr.mxu0 0.0
        %1333 = vmatpush1.xpose.msra.mxu0 0.0
        %1334 = vmatprep.subr.mxu0 0.0
        %1335 = vmatpush1.xpose.msra.mxu0 0.0
        %1336 = vmatprep.subr.mxu0 0.0
        %1337 = vmatpush1.xpose.msra.mxu0 0.0
        %1338 = vmatprep.subr.mxu0 0.0
        %1339 = vmatpush1.xpose.msra.mxu0 0.0
        %1340 = vmatprep.subr.mxu0 0.0
        %1341 = vmatpush1.xpose.msra.mxu0 0.0
        %1342 = vmatprep.subr.mxu0 0.0
        %1343 = vmatpush1.xpose.msra.mxu0 0.0
        %1344 = vmatprep.subr.mxu0 0.0
        %1345 = vmatpush1.xpose.msra.mxu0 0.0
        %1346 = vmatprep.subr.mxu0 0.0
        %1347 = vmatpush1.xpose.msra.mxu0 0.0
        %1348 = vmatprep.subr.mxu0 0.0
        %1349 = vmatpush1.xpose.msra.mxu0 0.0
        %1350 = vmatprep.subr.mxu0 0.0
        %1351 = vmatpush1.xpose.msra.mxu0 0.0
        %1352 = vmatprep.subr.mxu0 0.0
        %1353 = vmatpush1.xpose.msra.mxu0 0.0
        %1354 = vmatprep.subr.mxu0 0.0
        %1355 = vmatpush1.xpose.msra.mxu0 %v1322
        %1356 = vmatprep.subr.mxu0 0.0
        %1357 = vmatpush2.xpose.msra.mxu0 0.0
        %1358 = vmatprep.subr.mxu0 0.0
        %1359 = vmatpush2.xpose.msra.mxu0 0.0
        %1360 = vmatprep.subr.mxu0 0.0
        %1361 = vmatpush2.xpose.msra.mxu0 0.0
        %1362 = vmatprep.subr.mxu0 0.0
        %1363 = vmatpush2.xpose.msra.mxu0 0.0
        %1364 = vmatprep.subr.mxu0 0.0
        %1365 = vmatpush2.xpose.msra.mxu0 0.0
        %1366 = vmatprep.subr.mxu0 0.0
        %1367 = vmatpush2.xpose.msra.mxu0 0.0
        %1368 = vmatprep.subr.mxu0 0.0
        %1369 = vmatpush2.xpose.msra.mxu0 0.0
        %1370 = vmatprep.subr.mxu0 0.0
        %1371 = vmatpush2.xpose.msra.mxu0 0.0
        %1372 = vmatprep.subr.mxu0 0.0
        %1373 = vmatpush2.xpose.msra.mxu0 0.0
        %1374 = vmatprep.subr.mxu0 0.0
        %1375 = vmatpush2.xpose.msra.mxu0 0.0
        %1376 = vmatprep.subr.mxu0 0.0
        %1377 = vmatpush2.xpose.msra.mxu0 0.0
        %1378 = vmatprep.subr.mxu0 0.0
        %1379 = vmatpush2.xpose.msra.mxu0 0.0
        %1380 = vmatprep.subr.mxu0 0.0
        %1381 = vmatpush2.xpose.msra.mxu0 0.0
        %1382 = vmatprep.subr.mxu0 0.0
        %1383 = vmatpush2.xpose.msra.mxu0 0.0
        %1384 = vmatprep.subr.mxu0 0.0
        %1385 = vmatpush2.xpose.msra.mxu0 0.0
        %1386 = vmatprep.subr.mxu0 0.0
        %1387 = vmatpush2.xpose.msra.mxu0 0.0
        %1388 = vmatprep.mubr.f32.mxu0 0.0
        %1389 = vmatmul.mubr.f32.gmra.mxu0 %v1320
        %v1390 = vpop.f32.mrf.mxu0
        %v1391 = vadd.f32 0.0, %v1390
        %v1392 = vpop.f32.mrf.mxu0
        %1393 = vdwg.mxu0
        %v1394 = vsel %vm488, %v1391, -inf
        %1395 = vmax.xlane.f32.xlu0 %v1394
        %v1396 = vpop.xlane.xlu0 %1395
        %v1397 = vsub.f32 %v1391, %v1396
        %v1398 = vmul.f32 %v1397, 1.442695
        %v1399 = vpow.pop %v1398
        %v1400 = vsel %vm488, %v1399, 0.0
        %1401 = vadd.xlane.f32.xlu0 %v1400
        %v1402 = vpop.xlane.xlu0 %1401
        %1403 = vrot.lane.b32.xlu0 %v430, 80
        %v1404 = vpop.permute.xlu0 %1403
        %v1407 = vsel %vm488, %v1399, 0
        %1409 = vmatprep.subr.mxu0 0.0
        %1410 = vmatpush1.msra.mxu0 0.0
        %1411 = vmatprep.subr.mxu0 0.0
        %1412 = vmatpush1.msra.mxu0 0.0
        %1413 = vmatprep.subr.mxu0 0.0
        %1414 = vmatpush1.msra.mxu0 0.0
        %1415 = vmatprep.subr.mxu0 0.0
        %1416 = vmatpush1.msra.mxu0 0.0
        %1417 = vmatprep.subr.mxu0 0.0
        %1418 = vmatpush1.msra.mxu0 0.0
        %1419 = vmatprep.subr.mxu0 0.0
        %1420 = vmatpush1.msra.mxu0 0.0
        %1421 = vmatprep.subr.mxu0 0.0
        %1422 = vmatpush1.msra.mxu0 0.0
        %1423 = vmatprep.subr.mxu0 0.0
        %1424 = vmatpush1.msra.mxu0 0.0
        %1425 = vmatprep.subr.mxu0 0.0
        %1426 = vmatpush1.msra.mxu0 0.0
        %1427 = vmatprep.subr.mxu0 0.0
        %1428 = vmatpush1.msra.mxu0 0.0
        %1429 = vmatprep.subr.mxu0 0.0
        %1430 = vmatpush1.msra.mxu0 0.0
        %1431 = vmatprep.subr.mxu0 0.0
        %1432 = vmatpush1.msra.mxu0 0.0
        %1433 = vmatprep.subr.mxu0 0.0
        %1434 = vmatpush1.msra.mxu0 0.0
        %1435 = vmatprep.subr.mxu0 0.0
        %1436 = vmatpush1.msra.mxu0 0.0
        %1437 = vmatprep.subr.mxu0 0.0
        %1438 = vmatpush1.msra.mxu0 0.0
        %1439 = vmatprep.subr.mxu0 0.0
        %1440 = vmatpush1.msra.mxu0 %v1404
        %1441 = vmatprep.subr.mxu0 0.0
        %1442 = vmatpush2.msra.mxu0 0.0
        %1443 = vmatprep.subr.mxu0 0.0
        %1444 = vmatpush2.msra.mxu0 0.0
        %1445 = vmatprep.subr.mxu0 0.0
        %1446 = vmatpush2.msra.mxu0 0.0
        %1447 = vmatprep.subr.mxu0 0.0
        %1448 = vmatpush2.msra.mxu0 0.0
        %1449 = vmatprep.subr.mxu0 0.0
        %1450 = vmatpush2.msra.mxu0 0.0
        %1451 = vmatprep.subr.mxu0 0.0
        %1452 = vmatpush2.msra.mxu0 0.0
        %1453 = vmatprep.subr.mxu0 0.0
        %1454 = vmatpush2.msra.mxu0 0.0
        %1455 = vmatprep.subr.mxu0 0.0
        %1456 = vmatpush2.msra.mxu0 0.0
        %1457 = vmatprep.subr.mxu0 0.0
        %1458 = vmatpush2.msra.mxu0 0.0
        %1459 = vmatprep.subr.mxu0 0.0
        %1460 = vmatpush2.msra.mxu0 0.0
        %1461 = vmatprep.subr.mxu0 0.0
        %1462 = vmatpush2.msra.mxu0 0.0
        %1463 = vmatprep.subr.mxu0 0.0
        %1464 = vmatpush2.msra.mxu0 0.0
        %1465 = vmatprep.subr.mxu0 0.0
        %1466 = vmatpush2.msra.mxu0 0.0
        %1467 = vmatprep.subr.mxu0 0.0
        %1468 = vmatpush2.msra.mxu0 0.0
        %1469 = vmatprep.subr.mxu0 0.0
        %1470 = vmatpush2.msra.mxu0 0.0
        %1471 = vmatprep.subr.mxu0 0.0
        %1472 = vmatpush2.msra.mxu0 0.0
        %1473 = vmatprep.mubr.f32.mxu0 0.0
        %1474 = vmatmul.mubr.f32.gmra.mxu0 %v1407
        %v1475 = vpop.f32.mrf.mxu0
        %v1476 = vadd.f32 0.0, %v1475
        %v1477 = vpop.f32.mrf.mxu0
        %1478 = vdwg.mxu0
        %v1479 = vrcp.pop %v1402
        %v1480 = vmul.f32 %v1476, %v1479
        %v1482 = vsel %vm515, %v1480, 0
        %1484 = vmatprep.subr.mxu0 0.0
        %1485 = vmatpush1.msra.mxu0 0.0
        %1486 = vmatprep.subr.mxu0 0.0
        %1487 = vmatpush1.msra.mxu0 0.0
        %1488 = vmatprep.subr.mxu0 0.0
        %1489 = vmatpush1.msra.mxu0 0.0
        %1490 = vmatprep.subr.mxu0 0.0
        %1491 = vmatpush1.msra.mxu0 0.0
        %1492 = vmatprep.subr.mxu0 0.0
        %1493 = vmatpush1.msra.mxu0 0.0
        %1494 = vmatprep.subr.mxu0 0.0
        %1495 = vmatpush1.msra.mxu0 0.0
        %1496 = vmatprep.subr.mxu0 0.0
        %1497 = vmatpush1.msra.mxu0 0.0
        %1498 = vmatprep.subr.mxu0 0.0
        %1499 = vmatpush1.msra.mxu0 0.0
        %1500 = vmatprep.subr.mxu0 0.0
        %1501 = vmatpush1.msra.mxu0 0.0
        %1502 = vmatprep.subr.mxu0 0.0
        %1503 = vmatpush1.msra.mxu0 0.0
        %1504 = vmatprep.subr.mxu0 0.0
        %1505 = vmatpush1.msra.mxu0 0.0
        %1506 = vmatprep.subr.mxu0 0.0
        %1507 = vmatpush1.msra.mxu0 0.0
        %1508 = vmatprep.subr.mxu0 0.0
        %1509 = vmatpush1.msra.mxu0 0.0
        %1510 = vmatprep.subr.mxu0 0.0
        %1511 = vmatpush1.msra.mxu0 0.0
        %1512 = vmatprep.subr.mxu0 0.0
        %1513 = vmatpush1.msra.mxu0 %v480
        %1514 = vmatprep.subr.mxu0 0.0
        %1515 = vmatpush1.msra.mxu0 %v479
        %1516 = vmatprep.subr.mxu0 0.0
        %1517 = vmatpush2.msra.mxu0 0.0
        %1518 = vmatprep.subr.mxu0 0.0
        %1519 = vmatpush2.msra.mxu0 0.0
        %1520 = vmatprep.subr.mxu0 0.0
        %1521 = vmatpush2.msra.mxu0 0.0
        %1522 = vmatprep.subr.mxu0 0.0
        %1523 = vmatpush2.msra.mxu0 0.0
        %1524 = vmatprep.subr.mxu0 0.0
        %1525 = vmatpush2.msra.mxu0 0.0
        %1526 = vmatprep.subr.mxu0 0.0
        %1527 = vmatpush2.msra.mxu0 0.0
        %1528 = vmatprep.subr.mxu0 0.0
        %1529 = vmatpush2.msra.mxu0 0.0
        %1530 = vmatprep.subr.mxu0 0.0
        %1531 = vmatpush2.msra.mxu0 0.0
        %1532 = vmatprep.subr.mxu0 0.0
        %1533 = vmatpush2.msra.mxu0 0.0
        %1534 = vmatprep.subr.mxu0 0.0
        %1535 = vmatpush2.msra.mxu0 0.0
        %1536 = vmatprep.subr.mxu0 0.0
        %1537 = vmatpush2.msra.mxu0 0.0
        %1538 = vmatprep.subr.mxu0 0.0
        %1539 = vmatpush2.msra.mxu0 0.0
        %1540 = vmatprep.subr.mxu0 0.0
        %1541 = vmatpush2.msra.mxu0 0.0
        %1542 = vmatprep.subr.mxu0 0.0
        %1543 = vmatpush2.msra.mxu0 0.0
        %1544 = vmatprep.subr.mxu0 0.0
        %1545 = vmatpush2.msra.mxu0 0.0
        %1546 = vmatprep.subr.mxu0 0.0
        %1547 = vmatpush2.msra.mxu0 0.0
        %1548 = vmatprep.mubr.f32.mxu0 0.0
        %1549 = vmatmul.mubr.f32.gmra.mxu0 %v1482
        %v1550 = vpop.f32.mrf.mxu0
        %v1551 = vadd.f32 0.0, %v1550
        %v1552 = vpop.f32.mrf.mxu0
        %1553 = vdwg.mxu0
        %v1554 = vadd.f32 %v1285, %v1551
        %1555 = vst [vmem:[%s347] sm:$0xff] %v1554
        %s1556 = sand.u32 %s186, 1
        %s1557 = scalar_lea.sflag [#allocation4], %s1556
        %s1558 = sand.u32 %s186, 1
        %s1559 = smul.addr %s1558, 8
        %s1560 = scalar_lea.vmem [#allocation11], %s1559
        // Predicated region
        $region69: #{tpu_custom_call.1} parent=47 // pred_check
          %p1561 = pneg %p196
        $region70: #{tpu_custom_call.1} parent=47 // pred_check_branch
          %1563 = sbr.rel (%p1561) target = $region72
        $region71: #{tpu_custom_call.1} parent=47 // pred_region
          %s1565 = ssub.s32 128, 128
          %1566 = vsyncadd %s1557, %s1565
          %s1567 = smul.addr %s26, 128
          %s1568 = scalar_lea.hbm %s7, %s1567
          %s1570 = sshll.u32 %s1560, 4
          %s1571 = int_to_ptr.vmem [resolvable:$true] %s1570
          %1573 = dma.vmem_to_hbm [thread:$0]  %s1571, 128, %s1568, %s1557
        $region72: #{tpu_custom_call.1} parent=47 // pred_fallthru
          _
      $region48: #{tpu_custom_call.1} parent=5 // pred_fallthru
        _
      %p1574 = scmp.le.s32.totalorder 2, %s21
      // Predicated region
      $region73: #{tpu_custom_call.1} parent=5 // pred_check
        %p1575 = pneg %p1574
      $region74: #{tpu_custom_call.1} parent=5 // pred_check_branch
        %1577 = sbr.rel (%p1575) target = $region76
      $region75: #{tpu_custom_call.1} parent=5 // pred_region
        %s1578 = ssub.s32 %s21, 2
        // Predicated region
        $region77: #{tpu_custom_call.1} parent=75 // pred_check
          %p1579 = pneg %p202
        $region78: #{tpu_custom_call.1} parent=75 // pred_check_branch
          %1581 = sbr.rel (%p1579) target = $region80
        $region79: #{tpu_custom_call.1} parent=75 // pred_region
          %s1582 = sand.u32 %s187, 1
          %s1583 = scalar_lea.sflag [#allocation4], %s1582
          %s1584 = sand.u32 %s187, 1
          %s1585 = smul.addr %s1584, 8
          %s1586 = scalar_lea.vmem [#allocation11], %s1585
          %1587 = dma.done %s1583, 128
        $region80: #{tpu_custom_call.1} parent=75 // pred_fallthru
          _
      $region76: #{tpu_custom_call.1} parent=5 // pred_fallthru
        _
    $region6: #{tpu_custom_call.1} parent=1 // loop_footer
      %s25 = sadd.s32 1, %s21
    $region7: #{tpu_custom_call.1} parent=1 // loop_footer_branch
      %20 = sbr.rel target = $region3
    $region8: #{tpu_custom_call.1} parent=1 // loop_exit
      _
    %1588 = vsyncpa [#allocation3], 1
    %s1589 = scalar_lea.sflag [#allocation3], 1
    %1590 = vsyncpa %s1589, 1
    %1591 = vsyncpa [#allocation6], 1
    %1592 = vsyncpa [#allocation9], 1
    %1593 = vsyncpa [#allocation4], 1
    %s1594 = scalar_lea.sflag [#allocation4], 1
    %1595 = vsyncpa %s1594, 1

</llo_original>
